<compile_context>
chip_gen: v7x
topology: tpu7x:2x2x1
jax: 0.10.0
libtpu: 0.0.40
codegen_flags: <defaults>
</compile_context>

<pallas_src>
import functools

import numpy as np
import jax
import jax.numpy as jnp
from jax.experimental import pallas as pl
from jax.experimental.pallas import tpu as pltpu

EPS = 1e-5  # nn.BatchNorm2d default eps


# --------------------------------------------------------------------------
# Fused DoubleConv kernel:  conv3x3 -> BN -> ReLU -> conv3x3 -> BN -> ReLU
# Layout: channels on sublanes, flattened padded spatial (Lp = N*Hp*Wp -> x128) on lanes.
# --------------------------------------------------------------------------
def _double_conv_kernel(a_ref, b_ref, mask_ref,
                        w1_ref, g1_ref, b1_ref,
                        w2_ref, g2_ref, b2_ref,
                        out_ref,
                        i2c1_ref, i2c2_ref,
                        *, wp, inv_count):
    ca = a_ref.shape[0]                 # x2 (skip) channels -- first in concat order
    cin = i2c1_ref.shape[0] // 9        # total conv1 input channels
    cmid = w1_ref.shape[0]
    lp = out_ref.shape[1]               # 128-padded flattened spatial extent

    a = a_ref[...]                      # (Ca, Lp)
    b = b_ref[...]                      # (Cb, Lp)
    m = mask_ref[...]                   # (1, Lp) validity mask (interior pixels)

    # ---- conv1: im2col via XLU lane rolls (tap shift == +/-(dy*Wp+dx) rotation),
    #      channel-concat of the two sources fused here; ONE MXU matmul. ----
    for t in range(9):
        dy, dx = divmod(t, 3)
        s = (dy - 1) * wp + (dx - 1)
        sh = (-s) % lp                  # out[:, j] = in[:, j + s]  (jnp.roll semantics)
        ra = pltpu.roll(a, shift=sh, axis=1) if sh else a
        rb = pltpu.roll(b, shift=sh, axis=1) if sh else b
        i2c1_ref[t * cin:t * cin + ca, :] = ra
        i2c1_ref[t * cin + ca:(t + 1) * cin, :] = rb
    acc1 = jnp.dot(w1_ref[...], i2c1_ref[...],
                   preferred_element_type=jnp.float32)        # (Cmid, Lp), lane-dense

    # ---- BatchNorm (train-mode batch stats, fused masked one-pass) + ReLU ----
    # Conv bias omitted on purpose: a per-channel constant cancels exactly in (x - mean).
    s1 = jnp.sum(acc1 * m, axis=1, keepdims=True)
    q1 = jnp.sum(acc1 * acc1 * m, axis=1, keepdims=True)
    mu1 = s1 * inv_count
    var1 = jnp.maximum(q1 * inv_count - mu1 * mu1, 0.0)      # clamp: no NaN via rsqrt
    sc1 = g1_ref[...] * jax.lax.rsqrt(var1 + EPS)
    # mask => rim/garbage columns become the exact zero halo conv2 needs
    y1 = jnp.maximum(acc1 * sc1 + (b1_ref[...] - mu1 * sc1), 0.0) * m

    # ---- conv2: im2col via rolls of y1 directly (no staging buffer), ONE matmul ----
    for t in range(9):
        dy, dx = divmod(t, 3)
        s = (dy - 1) * wp + (dx - 1)
        sh = (-s) % lp
        i2c2_ref[t * cmid:(t + 1) * cmid, :] = \
            pltpu.roll(y1, shift=sh, axis=1) if sh else y1
    acc2 = jnp.dot(w2_ref[...], i2c2_ref[...],
                   preferred_element_type=jnp.float32)        # (Cout, Lp)

    s2 = jnp.sum(acc2 * m, axis=1, keepdims=True)
    q2 = jnp.sum(acc2 * acc2 * m, axis=1, keepdims=True)
    mu2 = s2 * inv_count
    var2 = jnp.maximum(q2 * inv_count - mu2 * mu2, 0.0)
    sc2 = g2_ref[...] * jax.lax.rsqrt(var2 + EPS)
    out_ref[...] = jnp.maximum(acc2 * sc2 + (b2_ref[...] - mu2 * sc2), 0.0)


def double_conv_pallas(x_a, x_b, params):
    """DoubleConv applied to channel-concat([x_a, x_b]); inputs/outputs NCHW f32."""
    w1, g1, b1, w2, g2, b2 = params                    # conv weights in OIHW
    N, Ca, H, W = x_a.shape
    _, Cb, _, _ = x_b.shape
    Cin = Ca + Cb
    Cmid, Cout = w1.shape[0], w2.shape[0]
    assert w1.shape[1] == Cin and w2.shape[1] == Cmid

    Hp, Wp = H + 2, W + 2                              # 1-pixel conv halo
    L = N * Hp * Wp                                    # flat padded spatial extent
    Lp = ((L + 127) // 128) * 128                      # lane-tile aligned extent
    count = N * H * W                                  # BN population size

    def flat_pad(x):
        # (N, C, H, W) -> channels-first (C, Lp): zero conv rim + zero lane pad.
        xc = jnp.transpose(x.astype(jnp.float32), (1, 0, 2, 3))
        xc = jnp.pad(xc, ((0, 0), (0, 0), (1, 1), (1, 1)))
        return jnp.pad(xc.reshape(xc.shape[0], L), ((0, 0), (0, Lp - L)))

    a = flat_pad(x_a)                                  # skip-connection channels first
    b = flat_pad(x_b)                                  # upsampled channels second

    # validity mask over flat padded coords (1 inside the N x H x W interior)
    yy, xx = np.meshgrid(np.arange(Hp), np.arange(Wp), indexing="ij")
    m2d = ((yy >= 1) & (yy <= H) & (xx >= 1) & (xx <= W)).astype(np.float32)
    mask_np = np.zeros((1, Lp), np.float32)
    mask_np[0, :L] = np.tile(m2d.reshape(-1), N)
    mask = jnp.asarray(mask_np)

    # weights as (Cout_like, 9*Cin_like) for a single im2col matmul per conv
    w1m = jnp.transpose(w1, (0, 2, 3, 1)).reshape(Cmid, 9 * Cin)
    w2m = jnp.transpose(w2, (0, 2, 3, 1)).reshape(Cout, 9 * Cmid)
    g1c, b1c = g1.reshape(Cmid, 1), b1.reshape(Cmid, 1)
    g2c, b2c = g2.reshape(Cout, 1), b2.reshape(Cout, 1)

    kernel = functools.partial(_double_conv_kernel, wp=Wp, inv_count=1.0 / count)

    flops = 2 * count * 9 * (Cin * Cmid + Cmid * Cout)
    bytes_accessed = 4 * (Lp * (Cin + 1 + Cout)
                          + 9 * (Cin * Cmid + Cmid * Cout) + 2 * (Cmid + Cout))
    scratch_bytes = 4 * Lp * 9 * (Cin + Cmid)
    # actual footprint (scratch + IO, inputs double-buffer-sized) + compiler headroom
    vmem_limit = scratch_bytes + 2 * bytes_accessed + (8 << 20)

    out_flat = pl.pallas_call(
        kernel,
        out_shape=jax.ShapeDtypeStruct((Cout, Lp), jnp.float32),
        scratch_shapes=[
            pltpu.VMEM((9 * Cin, Lp), jnp.float32),    # conv1 im2col
            pltpu.VMEM((9 * Cmid, Lp), jnp.float32),   # conv2 im2col
        ],
        compiler_params=pltpu.CompilerParams(vmem_limit_bytes=int(vmem_limit)),
        cost_estimate=pl.CostEstimate(flops=flops,
                                      transcendentals=Cmid + Cout,
                                      bytes_accessed=bytes_accessed),
    )(a, b, mask, w1m, g1c, b1c, w2m, g2c, b2c)

    # (Cout, Lp) -> drop lane pad + rim columns -> NCHW
    out = out_flat[:, :L].reshape(Cout, N, Hp, Wp)[:, :, 1:H + 1, 1:W + 1]
    return jnp.transpose(out, (1, 0, 2, 3))


# --------------------------------------------------------------------------
# Glue: bilinear 2x upsample (align_corners=True) + F.pad   (plain JAX, NCHW)
# --------------------------------------------------------------------------
def _bilinear_matrix(out_size, in_size):
    M = np.zeros((out_size, in_size), np.float32)
    if out_size == 1:
        M[0, 0] = 1.0
        return M
    scale = (in_size - 1) / (out_size - 1)
    for i in range(out_size):
        src = i * scale
        i0 = min(int(np.floor(src)), in_size - 1)
        i1 = min(i0 + 1, in_size - 1)
        f = src - i0
        M[i, i0] += 1.0 - f
        M[i, i1] += f
    return M


def up_forward(x1_nchw, x2_nchw, params):
    """Semantics of Up.forward(x1, x2) with bilinear=True. Inputs/outputs NCHW."""
    # conv biases are mathematically redundant under train-mode BN -> not used by kernel
    w1, _bc1, g1, b1, w2, _bc2, g2, b2 = params

    x1 = x1_nchw.astype(jnp.float32)
    x2 = x2_nchw.astype(jnp.float32)

    # bilinear 2x upsample, align_corners=True (separable dense matrices)
    _, _, H1, W1 = x1.shape
    Mh = jnp.asarray(_bilinear_matrix(2 * H1, H1))
    Mw = jnp.asarray(_bilinear_matrix(2 * W1, W1))
    x1u = jnp.einsum('ph,qw,nchw->ncpq', Mh, Mw, x1)

    # F.pad(x1, [dX//2, dX - dX//2, dY//2, dY - dY//2])
    diffY = x2.shape[2] - x1u.shape[2]
    diffX = x2.shape[3] - x1u.shape[3]
    x1u = jnp.pad(x1u, ((0, 0), (0, 0),
                        (diffY // 2, diffY - diffY // 2),
                        (diffX // 2, diffX - diffX // 2)))

    # torch.cat([x2, x1], dim=1) is fused into the kernel (no HBM concat)
    return double_conv_pallas(x2, x1u, (w1, g1, b1, w2, g2, b2))


# --------------------------------------------------------------------------
# Pure-JAX reference (independent check, includes conv biases)
# --------------------------------------------------------------------------
def _ref_up(x1_nchw, x2_nchw, params):
    w1, bc1, g1, b1, w2, bc2, g2, b2 = params
    x1 = x1_nchw.astype(jnp.float32)
    x2 = x2_nchw.astype(jnp.float32)
    _, _, H1, W1 = x1.shape
    Mh = jnp.asarray(_bilinear_matrix(2 * H1, H1))
    Mw = jnp.asarray(_bilinear_matrix(2 * W1, W1))
    x1u = jnp.einsum('ph,qw,nchw->ncpq', Mh, Mw, x1)
    diffY = x2.shape[2] - x1u.shape[2]
    diffX = x2.shape[3] - x1u.shape[3]
    x1u = jnp.pad(x1u, ((0, 0), (0, 0),
                        (diffY // 2, diffY - diffY // 2),
                        (diffX // 2, diffX - diffX // 2)))
    x = jnp.concatenate([x2, x1u], axis=1)

    def conv(x, w, b):
        y = jax.lax.conv_general_dilated(
            x, w, (1, 1), 'SAME', dimension_numbers=('NCHW', 'OIHW', 'NCHW'))
        return y + b.reshape(1, -1, 1, 1)

    def bn_relu(y, g, b):
        m = jnp.mean(y, axis=(0, 2, 3), keepdims=True)
        v = jnp.mean((y - m) ** 2, axis=(0, 2, 3), keepdims=True)
        z = (y - m) * jax.lax.rsqrt(v + EPS) * g.reshape(1, -1, 1, 1) \
            + b.reshape(1, -1, 1, 1)
        return jnp.maximum(z, 0.0)

    y = bn_relu(conv(x, w1, bc1), g1, b1)
    return bn_relu(conv(y, w2, bc2), g2, b2)


# --------------------------------------------------------------------------
if __name__ == "__main__":
    # Up(in_channels=8, out_channels=4, bilinear=True) -> DoubleConv(8, 4, mid=4)
    IN_CH, OUT_CH = 8, 4
    MID_CH = IN_CH // 2
    N = 2

    key = jax.random.PRNGKey(0)
    k1, k2, k3, k4, k5, k6, k7, k8, k9, k10 = jax.random.split(key, 10)

    # deterministic parameter init (shapes from the module __init__, torch OIHW layout)
    w1 = 0.1 * jax.random.normal(k1, (MID_CH, IN_CH, 3, 3), jnp.float32)
    bc1 = 0.01 * jax.random.normal(k2, (MID_CH,), jnp.float32)
    g1 = 1.0 + 0.1 * jax.random.normal(k7, (MID_CH,), jnp.float32)
    b1 = 0.05 * jax.random.normal(k8, (MID_CH,), jnp.float32)
    w2 = 0.1 * jax.random.normal(k3, (OUT_CH, MID_CH, 3, 3), jnp.float32)
    bc2 = 0.01 * jax.random.normal(k4, (OUT_CH,), jnp.float32)
    g2 = 1.0 + 0.1 * jax.random.normal(k9, (OUT_CH,), jnp.float32)
    b2 = 0.05 * jax.random.normal(k10, (OUT_CH,), jnp.float32)
    params = (w1, bc1, g1, b1, w2, bc2, g2, b2)

    # inputs (NCHW, like the PyTorch module): channels of x1 + x2 == IN_CH
    x1 = jax.random.normal(k5, (N, IN_CH // 2, 8, 8), jnp.float32)      # low-res
    x2 = jax.random.normal(k6, (N, IN_CH // 2, 16, 16), jnp.float32)    # skip

    up = jax.jit(up_forward)
    out = jax.block_until_ready(up(x1, x2, params))
    assert out.shape == (N, OUT_CH, 16, 16), out.shape

    # independent correctness check (reference includes conv biases; they cancel in BN)
    ref = jax.block_until_ready(_ref_up(x1, x2, params))
    np.testing.assert_allclose(np.asarray(out), np.asarray(ref),
                               rtol=1e-4, atol=1e-4)

    print("KERNEL_OK")
</pallas_src>

<mosaic_0001>
module attributes {stable_mosaic.version = 11 : i64} {
  func.func @_double_conv_kernel(%arg0: memref<4x768xf32, #tpu.memory_space<vmem>>, %arg1: memref<4x768xf32, #tpu.memory_space<vmem>>, %arg2: memref<1x768xf32, #tpu.memory_space<vmem>>, %arg3: memref<4x72xf32, #tpu.memory_space<vmem>>, %arg4: memref<4x1xf32, #tpu.memory_space<vmem>>, %arg5: memref<4x1xf32, #tpu.memory_space<vmem>>, %arg6: memref<4x36xf32, #tpu.memory_space<vmem>>, %arg7: memref<4x1xf32, #tpu.memory_space<vmem>>, %arg8: memref<4x1xf32, #tpu.memory_space<vmem>>, %arg9: memref<4x768xf32, #tpu.memory_space<vmem>>, %arg10: memref<72x768xf32, #tpu.memory_space<vmem>>, %arg11: memref<36x768xf32, #tpu.memory_space<vmem>>) attributes {dimension_semantics = [], scalar_prefetch = 0 : i64, scratch_operands = 2 : i64, tpu.core_type = #tpu.core_type<tc>} {
    %c0 = arith.constant 0 : index
    %c0_0 = arith.constant 0 : index
    %0 = vector.load %arg0[%c0, %c0_0] : memref<4x768xf32, #tpu.memory_space<vmem>>, vector<4x768xf32>
    %c0_1 = arith.constant 0 : index
    %c0_2 = arith.constant 0 : index
    %1 = vector.load %arg1[%c0_1, %c0_2] : memref<4x768xf32, #tpu.memory_space<vmem>>, vector<4x768xf32>
    %c0_3 = arith.constant 0 : index
    %c0_4 = arith.constant 0 : index
    %2 = vector.load %arg2[%c0_3, %c0_4] : memref<1x768xf32, #tpu.memory_space<vmem>>, vector<1x768xf32>
    %c19_i32 = arith.constant 19 : i32
    %3 = tpu.dynamic_rotate %0 by %c19_i32 dim 1 : vector<4x768xf32>, i32 -> vector<4x768xf32>
    %c19_i32_5 = arith.constant 19 : i32
    %4 = tpu.dynamic_rotate %1 by %c19_i32_5 dim 1 : vector<4x768xf32>, i32 -> vector<4x768xf32>
    %c0_6 = arith.constant 0 : index
    %c0_7 = arith.constant 0 : index
    %5 = vector.load %arg10[%c0_6, %c0_7] : memref<72x768xf32, #tpu.memory_space<vmem>>, vector<4x768xf32>
    tpu.vector_store %arg10[%c0_6, %c0_7], %3 {strides = array<i32>} : memref<72x768xf32, #tpu.memory_space<vmem>>, vector<4x768xf32>,
    %c4 = arith.constant 4 : index
    %c0_8 = arith.constant 0 : index
    %6 = vector.load %arg10[%c4, %c0_8] : memref<72x768xf32, #tpu.memory_space<vmem>>, vector<4x768xf32>
    tpu.vector_store %arg10[%c4, %c0_8], %4 {strides = array<i32>} : memref<72x768xf32, #tpu.memory_space<vmem>>, vector<4x768xf32>,
    %c18_i32 = arith.constant 18 : i32
    %7 = tpu.dynamic_rotate %0 by %c18_i32 dim 1 : vector<4x768xf32>, i32 -> vector<4x768xf32>
    %c18_i32_9 = arith.constant 18 : i32
    %8 = tpu.dynamic_rotate %1 by %c18_i32_9 dim 1 : vector<4x768xf32>, i32 -> vector<4x768xf32>
    %c8 = arith.constant 8 : index
    %c0_10 = arith.constant 0 : index
    %9 = vector.load %arg10[%c8, %c0_10] : memref<72x768xf32, #tpu.memory_space<vmem>>, vector<4x768xf32>
    tpu.vector_store %arg10[%c8, %c0_10], %7 {strides = array<i32>} : memref<72x768xf32, #tpu.memory_space<vmem>>, vector<4x768xf32>,
    %c12 = arith.constant 12 : index
    %c0_11 = arith.constant 0 : index
    %10 = vector.load %arg10[%c12, %c0_11] : memref<72x768xf32, #tpu.memory_space<vmem>>, vector<4x768xf32>
    tpu.vector_store %arg10[%c12, %c0_11], %8 {strides = array<i32>} : memref<72x768xf32, #tpu.memory_space<vmem>>, vector<4x768xf32>,
    %c17_i32 = arith.constant 17 : i32
    %11 = tpu.dynamic_rotate %0 by %c17_i32 dim 1 : vector<4x768xf32>, i32 -> vector<4x768xf32>
    %c17_i32_12 = arith.constant 17 : i32
    %12 = tpu.dynamic_rotate %1 by %c17_i32_12 dim 1 : vector<4x768xf32>, i32 -> vector<4x768xf32>
    %c16 = arith.constant 16 : index
    %c0_13 = arith.constant 0 : index
    %13 = vector.load %arg10[%c16, %c0_13] : memref<72x768xf32, #tpu.memory_space<vmem>>, vector<4x768xf32>
    tpu.vector_store %arg10[%c16, %c0_13], %11 {strides = array<i32>} : memref<72x768xf32, #tpu.memory_space<vmem>>, vector<4x768xf32>,
    %c20 = arith.constant 20 : index
    %c0_14 = arith.constant 0 : index
    %14 = vector.load %arg10[%c20, %c0_14] : memref<72x768xf32, #tpu.memory_space<vmem>>, vector<4x768xf32>
    tpu.vector_store %arg10[%c20, %c0_14], %12 {strides = array<i32>} : memref<72x768xf32, #tpu.memory_space<vmem>>, vector<4x768xf32>,
    %c1_i32 = arith.constant 1 : i32
    %15 = tpu.dynamic_rotate %0 by %c1_i32 dim 1 : vector<4x768xf32>, i32 -> vector<4x768xf32>
    %c1_i32_15 = arith.constant 1 : i32
    %16 = tpu.dynamic_rotate %1 by %c1_i32_15 dim 1 : vector<4x768xf32>, i32 -> vector<4x768xf32>
    %c24 = arith.constant 24 : index
    %c0_16 = arith.constant 0 : index
    %17 = vector.load %arg10[%c24, %c0_16] : memref<72x768xf32, #tpu.memory_space<vmem>>, vector<4x768xf32>
    tpu.vector_store %arg10[%c24, %c0_16], %15 {strides = array<i32>} : memref<72x768xf32, #tpu.memory_space<vmem>>, vector<4x768xf32>,
    %c28 = arith.constant 28 : index
    %c0_17 = arith.constant 0 : index
    %18 = vector.load %arg10[%c28, %c0_17] : memref<72x768xf32, #tpu.memory_space<vmem>>, vector<4x768xf32>
    tpu.vector_store %arg10[%c28, %c0_17], %16 {strides = array<i32>} : memref<72x768xf32, #tpu.memory_space<vmem>>, vector<4x768xf32>,
    %c32 = arith.constant 32 : index
    %c0_18 = arith.constant 0 : index
    %19 = vector.load %arg10[%c32, %c0_18] : memref<72x768xf32, #tpu.memory_space<vmem>>, vector<4x768xf32>
    tpu.vector_store %arg10[%c32, %c0_18], %0 {strides = array<i32>} : memref<72x768xf32, #tpu.memory_space<vmem>>, vector<4x768xf32>,
    %c36 = arith.constant 36 : index
    %c0_19 = arith.constant 0 : index
    %20 = vector.load %arg10[%c36, %c0_19] : memref<72x768xf32, #tpu.memory_space<vmem>>, vector<4x768xf32>
    tpu.vector_store %arg10[%c36, %c0_19], %1 {strides = array<i32>} : memref<72x768xf32, #tpu.memory_space<vmem>>, vector<4x768xf32>,
    %c767_i32 = arith.constant 767 : i32
    %21 = tpu.dynamic_rotate %0 by %c767_i32 dim 1 : vector<4x768xf32>, i32 -> vector<4x768xf32>
    %c767_i32_20 = arith.constant 767 : i32
    %22 = tpu.dynamic_rotate %1 by %c767_i32_20 dim 1 : vector<4x768xf32>, i32 -> vector<4x768xf32>
    %c40 = arith.constant 40 : index
    %c0_21 = arith.constant 0 : index
    %23 = vector.load %arg10[%c40, %c0_21] : memref<72x768xf32, #tpu.memory_space<vmem>>, vector<4x768xf32>
    tpu.vector_store %arg10[%c40, %c0_21], %21 {strides = array<i32>} : memref<72x768xf32, #tpu.memory_space<vmem>>, vector<4x768xf32>,
    %c44 = arith.constant 44 : index
    %c0_22 = arith.constant 0 : index
    %24 = vector.load %arg10[%c44, %c0_22] : memref<72x768xf32, #tpu.memory_space<vmem>>, vector<4x768xf32>
    tpu.vector_store %arg10[%c44, %c0_22], %22 {strides = array<i32>} : memref<72x768xf32, #tpu.memory_space<vmem>>, vector<4x768xf32>,
    %c751_i32 = arith.constant 751 : i32
    %25 = tpu.dynamic_rotate %0 by %c751_i32 dim 1 : vector<4x768xf32>, i32 -> vector<4x768xf32>
    %c751_i32_23 = arith.constant 751 : i32
    %26 = tpu.dynamic_rotate %1 by %c751_i32_23 dim 1 : vector<4x768xf32>, i32 -> vector<4x768xf32>
    %c48 = arith.constant 48 : index
    %c0_24 = arith.constant 0 : index
    %27 = vector.load %arg10[%c48, %c0_24] : memref<72x768xf32, #tpu.memory_space<vmem>>, vector<4x768xf32>
    tpu.vector_store %arg10[%c48, %c0_24], %25 {strides = array<i32>} : memref<72x768xf32, #tpu.memory_space<vmem>>, vector<4x768xf32>,
    %c52 = arith.constant 52 : index
    %c0_25 = arith.constant 0 : index
    %28 = vector.load %arg10[%c52, %c0_25] : memref<72x768xf32, #tpu.memory_space<vmem>>, vector<4x768xf32>
    tpu.vector_store %arg10[%c52, %c0_25], %26 {strides = array<i32>} : memref<72x768xf32, #tpu.memory_space<vmem>>, vector<4x768xf32>,
    %c750_i32 = arith.constant 750 : i32
    %29 = tpu.dynamic_rotate %0 by %c750_i32 dim 1 : vector<4x768xf32>, i32 -> vector<4x768xf32>
    %c750_i32_26 = arith.constant 750 : i32
    %30 = tpu.dynamic_rotate %1 by %c750_i32_26 dim 1 : vector<4x768xf32>, i32 -> vector<4x768xf32>
    %c56 = arith.constant 56 : index
    %c0_27 = arith.constant 0 : index
    %31 = vector.load %arg10[%c56, %c0_27] : memref<72x768xf32, #tpu.memory_space<vmem>>, vector<4x768xf32>
    tpu.vector_store %arg10[%c56, %c0_27], %29 {strides = array<i32>} : memref<72x768xf32, #tpu.memory_space<vmem>>, vector<4x768xf32>,
    %c60 = arith.constant 60 : index
    %c0_28 = arith.constant 0 : index
    %32 = vector.load %arg10[%c60, %c0_28] : memref<72x768xf32, #tpu.memory_space<vmem>>, vector<4x768xf32>
    tpu.vector_store %arg10[%c60, %c0_28], %30 {strides = array<i32>} : memref<72x768xf32, #tpu.memory_space<vmem>>, vector<4x768xf32>,
    %c749_i32 = arith.constant 749 : i32
    %33 = tpu.dynamic_rotate %0 by %c749_i32 dim 1 : vector<4x768xf32>, i32 -> vector<4x768xf32>
    %c749_i32_29 = arith.constant 749 : i32
    %34 = tpu.dynamic_rotate %1 by %c749_i32_29 dim 1 : vector<4x768xf32>, i32 -> vector<4x768xf32>
    %c64 = arith.constant 64 : index
    %c0_30 = arith.constant 0 : index
    %35 = vector.load %arg10[%c64, %c0_30] : memref<72x768xf32, #tpu.memory_space<vmem>>, vector<4x768xf32>
    tpu.vector_store %arg10[%c64, %c0_30], %33 {strides = array<i32>} : memref<72x768xf32, #tpu.memory_space<vmem>>, vector<4x768xf32>,
    %c68 = arith.constant 68 : index
    %c0_31 = arith.constant 0 : index
    %36 = vector.load %arg10[%c68, %c0_31] : memref<72x768xf32, #tpu.memory_space<vmem>>, vector<4x768xf32>
    tpu.vector_store %arg10[%c68, %c0_31], %34 {strides = array<i32>} : memref<72x768xf32, #tpu.memory_space<vmem>>, vector<4x768xf32>,
    %c0_32 = arith.constant 0 : index
    %c0_33 = arith.constant 0 : index
    %37 = vector.load %arg3[%c0_32, %c0_33] : memref<4x72xf32, #tpu.memory_space<vmem>>, vector<4x72xf32>
    %c0_34 = arith.constant 0 : index
    %c0_35 = arith.constant 0 : index
    %38 = vector.load %arg10[%c0_34, %c0_35] : memref<72x768xf32, #tpu.memory_space<vmem>>, vector<72x768xf32>
    %cst = arith.constant dense<0.000000e+00> : vector<4x768xf32>
    %39 = tpu.matmul %37, %38, %cst {dimension_numbers = #tpu.dot_dimension_numbers<[1], [0], [0], [1], [0, 0, 1, 1], [], []>} : vector<4x72xf32>, vector<72x768xf32>, vector<4x768xf32> -> vector<4x768xf32>
    %40 = vector.broadcast %2 : vector<1x768xf32> to vector<4x768xf32>
    %41 = arith.mulf %39, %40 : vector<4x768xf32>
    %cst_36 = arith.constant dense<0.000000e+00> : vector<4xf32>
    %42 = vector.multi_reduction <add>, %41, %cst_36 [1] : vector<4x768xf32> to vector<4xf32>
    %43 = vector.shape_cast %42 : vector<4xf32> to vector<4x1xf32>
    %44 = arith.mulf %39, %39 : vector<4x768xf32>
    %45 = vector.broadcast %2 : vector<1x768xf32> to vector<4x768xf32>
    %46 = arith.mulf %44, %45 : vector<4x768xf32>
    %cst_37 = arith.constant dense<0.000000e+00> : vector<4xf32>
    %47 = vector.multi_reduction <add>, %46, %cst_37 [1] : vector<4x768xf32> to vector<4xf32>
    %48 = vector.shape_cast %47 : vector<4xf32> to vector<4x1xf32>
    %cst_38 = arith.constant 0.001953125 : f32
    %49 = vector.broadcast %cst_38 : f32 to vector<4x1xf32>
    %50 = arith.mulf %43, %49 : vector<4x1xf32>
    %cst_39 = arith.constant 0.001953125 : f32
    %51 = vector.broadcast %cst_39 : f32 to vector<4x1xf32>
    %52 = arith.mulf %48, %51 : vector<4x1xf32>
    %53 = arith.mulf %50, %50 : vector<4x1xf32>
    %54 = arith.subf %52, %53 : vector<4x1xf32>
    %cst_40 = arith.constant 0.000000e+00 : f32
    %55 = vector.broadcast %cst_40 : f32 to vector<4x1xf32>
    %56 = arith.maximumf %54, %55 : vector<4x1xf32>
    %c0_41 = arith.constant 0 : index
    %c0_42 = arith.constant 0 : index
    %57 = vector.load %arg4[%c0_41, %c0_42] : memref<4x1xf32, #tpu.memory_space<vmem>>, vector<4x1xf32>
    %cst_43 = arith.constant 9.99999974E-6 : f32
    %58 = vector.broadcast %cst_43 : f32 to vector<4x1xf32>
    %59 = arith.addf %56, %58 : vector<4x1xf32>
    %60 = math.rsqrt %59 : vector<4x1xf32>
    %61 = arith.mulf %57, %60 : vector<4x1xf32>
    %62 = vector.broadcast %61 : vector<4x1xf32> to vector<4x768xf32>
    %63 = arith.mulf %39, %62 : vector<4x768xf32>
    %c0_44 = arith.constant 0 : index
    %c0_45 = arith.constant 0 : index
    %64 = vector.load %arg5[%c0_44, %c0_45] : memref<4x1xf32, #tpu.memory_space<vmem>>, vector<4x1xf32>
    %65 = arith.mulf %50, %61 : vector<4x1xf32>
    %66 = arith.subf %64, %65 : vector<4x1xf32>
    %67 = vector.broadcast %66 : vector<4x1xf32> to vector<4x768xf32>
    %68 = arith.addf %63, %67 : vector<4x768xf32>
    %cst_46 = arith.constant 0.000000e+00 : f32
    %69 = vector.broadcast %cst_46 : f32 to vector<4x768xf32>
    %70 = arith.maximumf %68, %69 : vector<4x768xf32>
    %71 = vector.broadcast %2 : vector<1x768xf32> to vector<4x768xf32>
    %72 = arith.mulf %70, %71 : vector<4x768xf32>
    %c19_i32_47 = arith.constant 19 : i32
    %73 = tpu.dynamic_rotate %72 by %c19_i32_47 dim 1 : vector<4x768xf32>, i32 -> vector<4x768xf32>
    %c0_48 = arith.constant 0 : index
    %c0_49 = arith.constant 0 : index
    %74 = vector.load %arg11[%c0_48, %c0_49] : memref<36x768xf32, #tpu.memory_space<vmem>>, vector<4x768xf32>
    tpu.vector_store %arg11[%c0_48, %c0_49], %73 {strides = array<i32>} : memref<36x768xf32, #tpu.memory_space<vmem>>, vector<4x768xf32>,
    %c18_i32_50 = arith.constant 18 : i32
    %75 = tpu.dynamic_rotate %72 by %c18_i32_50 dim 1 : vector<4x768xf32>, i32 -> vector<4x768xf32>
    %c4_51 = arith.constant 4 : index
    %c0_52 = arith.constant 0 : index
    %76 = vector.load %arg11[%c4_51, %c0_52] : memref<36x768xf32, #tpu.memory_space<vmem>>, vector<4x768xf32>
    tpu.vector_store %arg11[%c4_51, %c0_52], %75 {strides = array<i32>} : memref<36x768xf32, #tpu.memory_space<vmem>>, vector<4x768xf32>,
    %c17_i32_53 = arith.constant 17 : i32
    %77 = tpu.dynamic_rotate %72 by %c17_i32_53 dim 1 : vector<4x768xf32>, i32 -> vector<4x768xf32>
    %c8_54 = arith.constant 8 : index
    %c0_55 = arith.constant 0 : index
    %78 = vector.load %arg11[%c8_54, %c0_55] : memref<36x768xf32, #tpu.memory_space<vmem>>, vector<4x768xf32>
    tpu.vector_store %arg11[%c8_54, %c0_55], %77 {strides = array<i32>} : memref<36x768xf32, #tpu.memory_space<vmem>>, vector<4x768xf32>,
    %c1_i32_56 = arith.constant 1 : i32
    %79 = tpu.dynamic_rotate %72 by %c1_i32_56 dim 1 : vector<4x768xf32>, i32 -> vector<4x768xf32>
    %c12_57 = arith.constant 12 : index
    %c0_58 = arith.constant 0 : index
    %80 = vector.load %arg11[%c12_57, %c0_58] : memref<36x768xf32, #tpu.memory_space<vmem>>, vector<4x768xf32>
    tpu.vector_store %arg11[%c12_57, %c0_58], %79 {strides = array<i32>} : memref<36x768xf32, #tpu.memory_space<vmem>>, vector<4x768xf32>,
    %c16_59 = arith.constant 16 : index
    %c0_60 = arith.constant 0 : index
    %81 = vector.load %arg11[%c16_59, %c0_60] : memref<36x768xf32, #tpu.memory_space<vmem>>, vector<4x768xf32>
    tpu.vector_store %arg11[%c16_59, %c0_60], %72 {strides = array<i32>} : memref<36x768xf32, #tpu.memory_space<vmem>>, vector<4x768xf32>,
    %c767_i32_61 = arith.constant 767 : i32
    %82 = tpu.dynamic_rotate %72 by %c767_i32_61 dim 1 : vector<4x768xf32>, i32 -> vector<4x768xf32>
    %c20_62 = arith.constant 20 : index
    %c0_63 = arith.constant 0 : index
    %83 = vector.load %arg11[%c20_62, %c0_63] : memref<36x768xf32, #tpu.memory_space<vmem>>, vector<4x768xf32>
    tpu.vector_store %arg11[%c20_62, %c0_63], %82 {strides = array<i32>} : memref<36x768xf32, #tpu.memory_space<vmem>>, vector<4x768xf32>,
    %c751_i32_64 = arith.constant 751 : i32
    %84 = tpu.dynamic_rotate %72 by %c751_i32_64 dim 1 : vector<4x768xf32>, i32 -> vector<4x768xf32>
    %c24_65 = arith.constant 24 : index
    %c0_66 = arith.constant 0 : index
    %85 = vector.load %arg11[%c24_65, %c0_66] : memref<36x768xf32, #tpu.memory_space<vmem>>, vector<4x768xf32>
    tpu.vector_store %arg11[%c24_65, %c0_66], %84 {strides = array<i32>} : memref<36x768xf32, #tpu.memory_space<vmem>>, vector<4x768xf32>,
    %c750_i32_67 = arith.constant 750 : i32
    %86 = tpu.dynamic_rotate %72 by %c750_i32_67 dim 1 : vector<4x768xf32>, i32 -> vector<4x768xf32>
    %c28_68 = arith.constant 28 : index
    %c0_69 = arith.constant 0 : index
    %87 = vector.load %arg11[%c28_68, %c0_69] : memref<36x768xf32, #tpu.memory_space<vmem>>, vector<4x768xf32>
    tpu.vector_store %arg11[%c28_68, %c0_69], %86 {strides = array<i32>} : memref<36x768xf32, #tpu.memory_space<vmem>>, vector<4x768xf32>,
    %c749_i32_70 = arith.constant 749 : i32
    %88 = tpu.dynamic_rotate %72 by %c749_i32_70 dim 1 : vector<4x768xf32>, i32 -> vector<4x768xf32>
    %c32_71 = arith.constant 32 : index
    %c0_72 = arith.constant 0 : index
    %89 = vector.load %arg11[%c32_71, %c0_72] : memref<36x768xf32, #tpu.memory_space<vmem>>, vector<4x768xf32>
    tpu.vector_store %arg11[%c32_71, %c0_72], %88 {strides = array<i32>} : memref<36x768xf32, #tpu.memory_space<vmem>>, vector<4x768xf32>,
    %c0_73 = arith.constant 0 : index
    %c0_74 = arith.constant 0 : index
    %90 = vector.load %arg6[%c0_73, %c0_74] : memref<4x36xf32, #tpu.memory_space<vmem>>, vector<4x36xf32>
    %c0_75 = arith.constant 0 : index
    %c0_76 = arith.constant 0 : index
    %91 = vector.load %arg11[%c0_75, %c0_76] : memref<36x768xf32, #tpu.memory_space<vmem>>, vector<36x768xf32>
    %cst_77 = arith.constant dense<0.000000e+00> : vector<4x768xf32>
    %92 = tpu.matmul %90, %91, %cst_77 {dimension_numbers = #tpu.dot_dimension_numbers<[1], [0], [0], [1], [0, 0, 1, 1], [], []>} : vector<4x36xf32>, vector<36x768xf32>, vector<4x768xf32> -> vector<4x768xf32>
    %93 = vector.broadcast %2 : vector<1x768xf32> to vector<4x768xf32>
    %94 = arith.mulf %92, %93 : vector<4x768xf32>
    %cst_78 = arith.constant dense<0.000000e+00> : vector<4xf32>
    %95 = vector.multi_reduction <add>, %94, %cst_78 [1] : vector<4x768xf32> to vector<4xf32>
    %96 = vector.shape_cast %95 : vector<4xf32> to vector<4x1xf32>
    %97 = arith.mulf %92, %92 : vector<4x768xf32>
    %98 = vector.broadcast %2 : vector<1x768xf32> to vector<4x768xf32>
    %99 = arith.mulf %97, %98 : vector<4x768xf32>
    %cst_79 = arith.constant dense<0.000000e+00> : vector<4xf32>
    %100 = vector.multi_reduction <add>, %99, %cst_79 [1] : vector<4x768xf32> to vector<4xf32>
    %101 = vector.shape_cast %100 : vector<4xf32> to vector<4x1xf32>
    %cst_80 = arith.constant 0.001953125 : f32
    %102 = vector.broadcast %cst_80 : f32 to vector<4x1xf32>
    %103 = arith.mulf %96, %102 : vector<4x1xf32>
    %cst_81 = arith.constant 0.001953125 : f32
    %104 = vector.broadcast %cst_81 : f32 to vector<4x1xf32>
    %105 = arith.mulf %101, %104 : vector<4x1xf32>
    %106 = arith.mulf %103, %103 : vector<4x1xf32>
    %107 = arith.subf %105, %106 : vector<4x1xf32>
    %cst_82 = arith.constant 0.000000e+00 : f32
    %108 = vector.broadcast %cst_82 : f32 to vector<4x1xf32>
    %109 = arith.maximumf %107, %108 : vector<4x1xf32>
    %c0_83 = arith.constant 0 : index
    %c0_84 = arith.constant 0 : index
    %110 = vector.load %arg7[%c0_83, %c0_84] : memref<4x1xf32, #tpu.memory_space<vmem>>, vector<4x1xf32>
    %cst_85 = arith.constant 9.99999974E-6 : f32
    %111 = vector.broadcast %cst_85 : f32 to vector<4x1xf32>
    %112 = arith.addf %109, %111 : vector<4x1xf32>
    %113 = math.rsqrt %112 : vector<4x1xf32>
    %114 = arith.mulf %110, %113 : vector<4x1xf32>
    %115 = vector.broadcast %114 : vector<4x1xf32> to vector<4x768xf32>
    %116 = arith.mulf %92, %115 : vector<4x768xf32>
    %c0_86 = arith.constant 0 : index
    %c0_87 = arith.constant 0 : index
    %117 = vector.load %arg8[%c0_86, %c0_87] : memref<4x1xf32, #tpu.memory_space<vmem>>, vector<4x1xf32>
    %118 = arith.mulf %103, %114 : vector<4x1xf32>
    %119 = arith.subf %117, %118 : vector<4x1xf32>
    %120 = vector.broadcast %119 : vector<4x1xf32> to vector<4x768xf32>
    %121 = arith.addf %116, %120 : vector<4x768xf32>
    %cst_88 = arith.constant 0.000000e+00 : f32
    %122 = vector.broadcast %cst_88 : f32 to vector<4x768xf32>
    %123 = arith.maximumf %121, %122 : vector<4x768xf32>
    %c0_89 = arith.constant 0 : index
    %c0_90 = arith.constant 0 : index
    %124 = vector.load %arg9[%c0_89, %c0_90] : memref<4x768xf32, #tpu.memory_space<vmem>>, vector<4x768xf32>
    tpu.vector_store %arg9[%c0_89, %c0_90], %123 {strides = array<i32>} : memref<4x768xf32, #tpu.memory_space<vmem>>, vector<4x768xf32>,
    return
  }
}

</mosaic_0001>

<llo_original>
// kernel: up_forward.1
$region0: #{up_forward.1}
  #allocation0 [shape = 'u32[]', space=smem, size = 0x4, offset = 0x4, fixed_abs, tag = 'smem constant byte address 0x4 - core index']
  #allocation1 [shape = 'u32[144,128]{1,0:T(1,128)}', space=vmem, size = 0x12000, scoped, tag = 'internal scratch']
  #allocation2 [shape = 'f32[72,768]{1,0:T(8,128)}', space=vmem, size = 0x36000, scoped, tag = 'scratch operand']
  #allocation3 [shape = 'f32[36,768]{1,0:T(8,128)}', space=vmem, size = 0x1e000, scoped, tag = 'scratch operand']
  %s0 = inlined_call_operand.vmem [shape: f32[4,768], index: 0, kind: input, shape index: {}]
  %s1 = inlined_call_operand.vmem [shape: f32[4,768], index: 1, kind: input, shape index: {}]
  %s2 = inlined_call_operand.vmem [shape: f32[1,768], index: 2, kind: input, shape index: {}]
  %s3 = inlined_call_operand.vmem [shape: f32[4,72], index: 3, kind: input, shape index: {}]
  %s4 = inlined_call_operand.vmem [shape: f32[4,1], index: 4, kind: input, shape index: {}]
  %s5 = inlined_call_operand.vmem [shape: f32[4,1], index: 5, kind: input, shape index: {}]
  %s6 = inlined_call_operand.vmem [shape: f32[4,36], index: 6, kind: input, shape index: {}]
  %s7 = inlined_call_operand.vmem [shape: f32[4,1], index: 7, kind: input, shape index: {}]
  %s8 = inlined_call_operand.vmem [shape: f32[4,1], index: 8, kind: input, shape index: {}]
  %s9 = inlined_call_operand.vmem [shape: f32[4,768], index: 9, kind: output, shape index: {}]
  %s10 = sld [smem:[#allocation0]]
  $region46: #{up_forward.1} parent=0
    _
  %s12 = ssub.s32 1, %s10
  %s13 = scalar_select 0, %s12, %s10
  // Predicated region
  $region2: #{up_forward.1} parent=0 // pred_check
    _
  $region3: #{up_forward.1} parent=0 // pred_check_branch
    %15 = sbr.rel (0) target = $region5
  $region4: #{up_forward.1} parent=0 // pred_region
    _
  $region5: #{up_forward.1} parent=0 // pred_fallthru
    _
  // Predicated region
  $region6: #{up_forward.1} parent=0 // pred_check
    _
  $region7: #{up_forward.1} parent=0 // pred_check_branch
    %17 = sbr.rel (0) target = $region9
  $region8: #{up_forward.1} parent=0 // pred_region
    _
  $region9: #{up_forward.1} parent=0 // pred_fallthru
    _
  // Predicated region
  $region10: #{up_forward.1} parent=0 // pred_check
    _
  $region11: #{up_forward.1} parent=0 // pred_check_branch
    %19 = sbr.rel (0) target = $region13
  $region12: #{up_forward.1} parent=0 // pred_region
    _
  $region13: #{up_forward.1} parent=0 // pred_fallthru
    _
  // Predicated region
  $region14: #{up_forward.1} parent=0 // pred_check
    _
  $region15: #{up_forward.1} parent=0 // pred_check_branch
    %21 = sbr.rel (0) target = $region17
  $region16: #{up_forward.1} parent=0 // pred_region
    _
  $region17: #{up_forward.1} parent=0 // pred_fallthru
    _
  // Predicated region
  $region18: #{up_forward.1} parent=0 // pred_check
    _
  $region19: #{up_forward.1} parent=0 // pred_check_branch
    %23 = sbr.rel (0) target = $region21
  $region20: #{up_forward.1} parent=0 // pred_region
    _
  $region21: #{up_forward.1} parent=0 // pred_fallthru
    _
  // Predicated region
  $region22: #{up_forward.1} parent=0 // pred_check
    _
  $region23: #{up_forward.1} parent=0 // pred_check_branch
    %25 = sbr.rel (0) target = $region25
  $region24: #{up_forward.1} parent=0 // pred_region
    _
  $region25: #{up_forward.1} parent=0 // pred_fallthru
    _
  // Predicated region
  $region26: #{up_forward.1} parent=0 // pred_check
    _
  $region27: #{up_forward.1} parent=0 // pred_check_branch
    %27 = sbr.rel (0) target = $region29
  $region28: #{up_forward.1} parent=0 // pred_region
    _
  $region29: #{up_forward.1} parent=0 // pred_fallthru
    _
  // Predicated region
  $region30: #{up_forward.1} parent=0 // pred_check
    _
  $region31: #{up_forward.1} parent=0 // pred_check_branch
    %29 = sbr.rel (0) target = $region33
  $region32: #{up_forward.1} parent=0 // pred_region
    _
  $region33: #{up_forward.1} parent=0 // pred_fallthru
    _
  // Predicated region
  $region34: #{up_forward.1} parent=0 // pred_check
    _
  $region35: #{up_forward.1} parent=0 // pred_check_branch
    %31 = sbr.rel (0) target = $region37
  $region36: #{up_forward.1} parent=0 // pred_region
    _
  $region37: #{up_forward.1} parent=0 // pred_fallthru
    _
  %v32 = vld [vmem:[%s0] sm:$0xff]
  %v33 = vld [vmem:[%s0 + $0x8] sm:$0xff]
  %v34 = vld [vmem:[%s0 + $0x10] sm:$0xff]
  %v35 = vld [vmem:[%s1] sm:$0xff]
  %v36 = vld [vmem:[%s1 + $0x8] sm:$0xff]
  %v37 = vld [vmem:[%s1 + $0x10] sm:$0xff]
  %v38 = vld [vmem:[%s2] sm:$0x3f]
  %v42 = vcombine.high %v32, %v32
  %v43 = vcombine.high %v33, %v33
  %v44 = vcombine.high %v34, %v34
  %48 = vrot.lane.b32.xlu0 %v32, 19
  %v49 = vpop.permute.xlu0 %48
  %50 = vrot.lane.b32.xlu0 %v42, 19
  %v51 = vpop.permute.xlu0 %50
  %52 = vrot.lane.b32.xlu0 %v33, 19
  %v53 = vpop.permute.xlu0 %52
  %54 = vrot.lane.b32.xlu0 %v43, 19
  %v55 = vpop.permute.xlu0 %54
  %56 = vrot.lane.b32.xlu0 %v34, 19
  %v57 = vpop.permute.xlu0 %56
  %58 = vrot.lane.b32.xlu0 %v44, 19
  %v59 = vpop.permute.xlu0 %58
  %v60 = vlaneseq
  %v61 = vand.u32 %v60, 127
  %vm62 = vcmp.lt.s32.totalorder %v61, 19
  %v63 = vsel %vm62, %v57, %v59
  %v64 = vsel %vm62, %v55, %v57
  %v65 = vsel %vm62, %v53, %v55
  %v66 = vsel %vm62, %v51, %v53
  %v67 = vsel %vm62, %v49, %v51
  %v68 = vsel %vm62, %v59, %v49
  %v72 = vcombine.high %v35, %v35
  %v73 = vcombine.high %v36, %v36
  %v74 = vcombine.high %v37, %v37
  %78 = vrot.lane.b32.xlu0 %v35, 19
  %v79 = vpop.permute.xlu0 %78
  %80 = vrot.lane.b32.xlu0 %v72, 19
  %v81 = vpop.permute.xlu0 %80
  %82 = vrot.lane.b32.xlu0 %v36, 19
  %v83 = vpop.permute.xlu0 %82
  %84 = vrot.lane.b32.xlu0 %v73, 19
  %v85 = vpop.permute.xlu0 %84
  %86 = vrot.lane.b32.xlu0 %v37, 19
  %v87 = vpop.permute.xlu0 %86
  %88 = vrot.lane.b32.xlu0 %v74, 19
  %v89 = vpop.permute.xlu0 %88
  %v90 = vsel %vm62, %v87, %v89
  %v91 = vsel %vm62, %v85, %v87
  %v92 = vsel %vm62, %v83, %v85
  %v93 = vsel %vm62, %v81, %v83
  %v94 = vsel %vm62, %v79, %v81
  %v95 = vsel %vm62, %v89, %v79
  %96 = vst [vmem:[#allocation2] sm:$0xf] %v68
  %97 = vst [vmem:[#allocation2 + $0x8] sm:$0xf] %v67
  %98 = vst [vmem:[#allocation2 + $0x10] sm:$0xf] %v66
  %99 = vst [vmem:[#allocation2 + $0x18] sm:$0xf] %v65
  %100 = vst [vmem:[#allocation2 + $0x20] sm:$0xf] %v64
  %101 = vst [vmem:[#allocation2 + $0x28] sm:$0xf] %v63
  %v108 = vrot.slane %v95, 4
  %v109 = vrot.slane %v94, 4
  %v110 = vrot.slane %v93, 4
  %v111 = vrot.slane %v92, 4
  %v112 = vrot.slane %v91, 4
  %v113 = vrot.slane %v90, 4
  %120 = vst [vmem:[#allocation2] sm:$0xf0] %v108
  %121 = vst [vmem:[#allocation2 + $0x8] sm:$0xf0] %v109
  %122 = vst [vmem:[#allocation2 + $0x10] sm:$0xf0] %v110
  %123 = vst [vmem:[#allocation2 + $0x18] sm:$0xf0] %v111
  %124 = vst [vmem:[#allocation2 + $0x20] sm:$0xf0] %v112
  %125 = vst [vmem:[#allocation2 + $0x28] sm:$0xf0] %v113
  %126 = vrot.lane.b32.xlu0 %v32, 18
  %v127 = vpop.permute.xlu0 %126
  %128 = vrot.lane.b32.xlu0 %v42, 18
  %v129 = vpop.permute.xlu0 %128
  %130 = vrot.lane.b32.xlu0 %v33, 18
  %v131 = vpop.permute.xlu0 %130
  %132 = vrot.lane.b32.xlu0 %v43, 18
  %v133 = vpop.permute.xlu0 %132
  %134 = vrot.lane.b32.xlu0 %v34, 18
  %v135 = vpop.permute.xlu0 %134
  %136 = vrot.lane.b32.xlu0 %v44, 18
  %v137 = vpop.permute.xlu0 %136
  %vm138 = vcmp.lt.s32.totalorder %v61, 18
  %v139 = vsel %vm138, %v135, %v137
  %v140 = vsel %vm138, %v133, %v135
  %v141 = vsel %vm138, %v131, %v133
  %v142 = vsel %vm138, %v129, %v131
  %v143 = vsel %vm138, %v127, %v129
  %v144 = vsel %vm138, %v137, %v127
  %145 = vrot.lane.b32.xlu0 %v35, 18
  %v146 = vpop.permute.xlu0 %145
  %147 = vrot.lane.b32.xlu0 %v72, 18
  %v148 = vpop.permute.xlu0 %147
  %149 = vrot.lane.b32.xlu0 %v36, 18
  %v150 = vpop.permute.xlu0 %149
  %151 = vrot.lane.b32.xlu0 %v73, 18
  %v152 = vpop.permute.xlu0 %151
  %153 = vrot.lane.b32.xlu0 %v37, 18
  %v154 = vpop.permute.xlu0 %153
  %155 = vrot.lane.b32.xlu0 %v74, 18
  %v156 = vpop.permute.xlu0 %155
  %v157 = vsel %vm138, %v154, %v156
  %v158 = vsel %vm138, %v152, %v154
  %v159 = vsel %vm138, %v150, %v152
  %v160 = vsel %vm138, %v148, %v150
  %v161 = vsel %vm138, %v146, %v148
  %v162 = vsel %vm138, %v156, %v146
  %163 = vst [vmem:[#allocation2 + $0x30] sm:$0xf] %v144
  %164 = vst [vmem:[#allocation2 + $0x38] sm:$0xf] %v143
  %165 = vst [vmem:[#allocation2 + $0x40] sm:$0xf] %v142
  %166 = vst [vmem:[#allocation2 + $0x48] sm:$0xf] %v141
  %167 = vst [vmem:[#allocation2 + $0x50] sm:$0xf] %v140
  %168 = vst [vmem:[#allocation2 + $0x58] sm:$0xf] %v139
  %v175 = vrot.slane %v162, 4
  %v176 = vrot.slane %v161, 4
  %v177 = vrot.slane %v160, 4
  %v178 = vrot.slane %v159, 4
  %v179 = vrot.slane %v158, 4
  %v180 = vrot.slane %v157, 4
  %187 = vst [vmem:[#allocation2 + $0x30] sm:$0xf0] %v175
  %188 = vst [vmem:[#allocation2 + $0x38] sm:$0xf0] %v176
  %189 = vst [vmem:[#allocation2 + $0x40] sm:$0xf0] %v177
  %190 = vst [vmem:[#allocation2 + $0x48] sm:$0xf0] %v178
  %191 = vst [vmem:[#allocation2 + $0x50] sm:$0xf0] %v179
  %192 = vst [vmem:[#allocation2 + $0x58] sm:$0xf0] %v180
  %193 = vrot.lane.b32.xlu0 %v32, 17
  %v194 = vpop.permute.xlu0 %193
  %195 = vrot.lane.b32.xlu0 %v42, 17
  %v196 = vpop.permute.xlu0 %195
  %197 = vrot.lane.b32.xlu0 %v33, 17
  %v198 = vpop.permute.xlu0 %197
  %199 = vrot.lane.b32.xlu0 %v43, 17
  %v200 = vpop.permute.xlu0 %199
  %201 = vrot.lane.b32.xlu0 %v34, 17
  %v202 = vpop.permute.xlu0 %201
  %203 = vrot.lane.b32.xlu0 %v44, 17
  %v204 = vpop.permute.xlu0 %203
  %vm205 = vcmp.lt.s32.totalorder %v61, 17
  %v206 = vsel %vm205, %v202, %v204
  %v207 = vsel %vm205, %v200, %v202
  %v208 = vsel %vm205, %v198, %v200
  %v209 = vsel %vm205, %v196, %v198
  %v210 = vsel %vm205, %v194, %v196
  %v211 = vsel %vm205, %v204, %v194
  %212 = vrot.lane.b32.xlu0 %v35, 17
  %v213 = vpop.permute.xlu0 %212
  %214 = vrot.lane.b32.xlu0 %v72, 17
  %v215 = vpop.permute.xlu0 %214
  %216 = vrot.lane.b32.xlu0 %v36, 17
  %v217 = vpop.permute.xlu0 %216
  %218 = vrot.lane.b32.xlu0 %v73, 17
  %v219 = vpop.permute.xlu0 %218
  %220 = vrot.lane.b32.xlu0 %v37, 17
  %v221 = vpop.permute.xlu0 %220
  %222 = vrot.lane.b32.xlu0 %v74, 17
  %v223 = vpop.permute.xlu0 %222
  %v224 = vsel %vm205, %v221, %v223
  %v225 = vsel %vm205, %v219, %v221
  %v226 = vsel %vm205, %v217, %v219
  %v227 = vsel %vm205, %v215, %v217
  %v228 = vsel %vm205, %v213, %v215
  %v229 = vsel %vm205, %v223, %v213
  %230 = vst [vmem:[#allocation2 + $0x60] sm:$0xf] %v211
  %231 = vst [vmem:[#allocation2 + $0x68] sm:$0xf] %v210
  %232 = vst [vmem:[#allocation2 + $0x70] sm:$0xf] %v209
  %233 = vst [vmem:[#allocation2 + $0x78] sm:$0xf] %v208
  %234 = vst [vmem:[#allocation2 + $0x80] sm:$0xf] %v207
  %235 = vst [vmem:[#allocation2 + $0x88] sm:$0xf] %v206
  %v242 = vrot.slane %v229, 4
  %v243 = vrot.slane %v228, 4
  %v244 = vrot.slane %v227, 4
  %v245 = vrot.slane %v226, 4
  %v246 = vrot.slane %v225, 4
  %v247 = vrot.slane %v224, 4
  %254 = vst [vmem:[#allocation2 + $0x60] sm:$0xf0] %v242
  %255 = vst [vmem:[#allocation2 + $0x68] sm:$0xf0] %v243
  %256 = vst [vmem:[#allocation2 + $0x70] sm:$0xf0] %v244
  %257 = vst [vmem:[#allocation2 + $0x78] sm:$0xf0] %v245
  %258 = vst [vmem:[#allocation2 + $0x80] sm:$0xf0] %v246
  %259 = vst [vmem:[#allocation2 + $0x88] sm:$0xf0] %v247
  %260 = vrot.lane.b32.xlu0 %v32, 1
  %v261 = vpop.permute.xlu0 %260
  %262 = vrot.lane.b32.xlu0 %v42, 1
  %v263 = vpop.permute.xlu0 %262
  %264 = vrot.lane.b32.xlu0 %v33, 1
  %v265 = vpop.permute.xlu0 %264
  %266 = vrot.lane.b32.xlu0 %v43, 1
  %v267 = vpop.permute.xlu0 %266
  %268 = vrot.lane.b32.xlu0 %v34, 1
  %v269 = vpop.permute.xlu0 %268
  %270 = vrot.lane.b32.xlu0 %v44, 1
  %v271 = vpop.permute.xlu0 %270
  %vm272 = vcmp.lt.s32.totalorder %v61, 1
  %v273 = vsel %vm272, %v269, %v271
  %v274 = vsel %vm272, %v267, %v269
  %v275 = vsel %vm272, %v265, %v267
  %v276 = vsel %vm272, %v263, %v265
  %v277 = vsel %vm272, %v261, %v263
  %v278 = vsel %vm272, %v271, %v261
  %279 = vrot.lane.b32.xlu0 %v35, 1
  %v280 = vpop.permute.xlu0 %279
  %281 = vrot.lane.b32.xlu0 %v72, 1
  %v282 = vpop.permute.xlu0 %281
  %283 = vrot.lane.b32.xlu0 %v36, 1
  %v284 = vpop.permute.xlu0 %283
  %285 = vrot.lane.b32.xlu0 %v73, 1
  %v286 = vpop.permute.xlu0 %285
  %287 = vrot.lane.b32.xlu0 %v37, 1
  %v288 = vpop.permute.xlu0 %287
  %289 = vrot.lane.b32.xlu0 %v74, 1
  %v290 = vpop.permute.xlu0 %289
  %v291 = vsel %vm272, %v288, %v290
  %v292 = vsel %vm272, %v286, %v288
  %v293 = vsel %vm272, %v284, %v286
  %v294 = vsel %vm272, %v282, %v284
  %v295 = vsel %vm272, %v280, %v282
  %v296 = vsel %vm272, %v290, %v280
  %297 = vst [vmem:[#allocation2 + $0x90] sm:$0xf] %v278
  %298 = vst [vmem:[#allocation2 + $0x98] sm:$0xf] %v277
  %299 = vst [vmem:[#allocation2 + $0xa0] sm:$0xf] %v276
  %300 = vst [vmem:[#allocation2 + $0xa8] sm:$0xf] %v275
  %301 = vst [vmem:[#allocation2 + $0xb0] sm:$0xf] %v274
  %302 = vst [vmem:[#allocation2 + $0xb8] sm:$0xf] %v273
  %v309 = vrot.slane %v296, 4
  %v310 = vrot.slane %v295, 4
  %v311 = vrot.slane %v294, 4
  %v312 = vrot.slane %v293, 4
  %v313 = vrot.slane %v292, 4
  %v314 = vrot.slane %v291, 4
  %321 = vst [vmem:[#allocation2 + $0x90] sm:$0xf0] %v309
  %322 = vst [vmem:[#allocation2 + $0x98] sm:$0xf0] %v310
  %323 = vst [vmem:[#allocation2 + $0xa0] sm:$0xf0] %v311
  %324 = vst [vmem:[#allocation2 + $0xa8] sm:$0xf0] %v312
  %325 = vst [vmem:[#allocation2 + $0xb0] sm:$0xf0] %v313
  %326 = vst [vmem:[#allocation2 + $0xb8] sm:$0xf0] %v314
  %327 = vst [vmem:[#allocation2 + $0xc0] sm:$0xf] %v32
  %328 = vst [vmem:[#allocation2 + $0xc8] sm:$0xf] %v42
  %329 = vst [vmem:[#allocation2 + $0xd0] sm:$0xf] %v33
  %330 = vst [vmem:[#allocation2 + $0xd8] sm:$0xf] %v43
  %331 = vst [vmem:[#allocation2 + $0xe0] sm:$0xf] %v34
  %332 = vst [vmem:[#allocation2 + $0xe8] sm:$0xf] %v44
  %v333 = vcombine.low %v35, %v35
  %v334 = vcombine.low %v36, %v36
  %v335 = vcombine.low %v37, %v37
  %339 = vst [vmem:[#allocation2 + $0xc0] sm:$0xf0] %v333
  %340 = vst [vmem:[#allocation2 + $0xc8] sm:$0xf0] %v35
  %341 = vst [vmem:[#allocation2 + $0xd0] sm:$0xf0] %v334
  %342 = vst [vmem:[#allocation2 + $0xd8] sm:$0xf0] %v36
  %343 = vst [vmem:[#allocation2 + $0xe0] sm:$0xf0] %v335
  %344 = vst [vmem:[#allocation2 + $0xe8] sm:$0xf0] %v37
  %345 = vrot.lane.b32.xlu0 %v32, 127
  %v346 = vpop.permute.xlu0 %345
  %347 = vrot.lane.b32.xlu0 %v42, 127
  %v348 = vpop.permute.xlu0 %347
  %349 = vrot.lane.b32.xlu0 %v33, 127
  %v350 = vpop.permute.xlu0 %349
  %351 = vrot.lane.b32.xlu0 %v43, 127
  %v352 = vpop.permute.xlu0 %351
  %353 = vrot.lane.b32.xlu0 %v34, 127
  %v354 = vpop.permute.xlu0 %353
  %355 = vrot.lane.b32.xlu0 %v44, 127
  %v356 = vpop.permute.xlu0 %355
  %vm357 = vcmp.lt.s32.totalorder %v61, 127
  %v358 = vsel %vm357, %v354, %v356
  %v359 = vsel %vm357, %v352, %v354
  %v360 = vsel %vm357, %v350, %v352
  %v361 = vsel %vm357, %v348, %v350
  %v362 = vsel %vm357, %v346, %v348
  %v363 = vsel %vm357, %v356, %v346
  %364 = vrot.lane.b32.xlu0 %v35, 127
  %v365 = vpop.permute.xlu0 %364
  %366 = vrot.lane.b32.xlu0 %v72, 127
  %v367 = vpop.permute.xlu0 %366
  %368 = vrot.lane.b32.xlu0 %v36, 127
  %v369 = vpop.permute.xlu0 %368
  %370 = vrot.lane.b32.xlu0 %v73, 127
  %v371 = vpop.permute.xlu0 %370
  %372 = vrot.lane.b32.xlu0 %v37, 127
  %v373 = vpop.permute.xlu0 %372
  %374 = vrot.lane.b32.xlu0 %v74, 127
  %v375 = vpop.permute.xlu0 %374
  %v376 = vsel %vm357, %v373, %v375
  %v377 = vsel %vm357, %v371, %v373
  %v378 = vsel %vm357, %v369, %v371
  %v379 = vsel %vm357, %v367, %v369
  %v380 = vsel %vm357, %v365, %v367
  %v381 = vsel %vm357, %v375, %v365
  %382 = vst [vmem:[#allocation2 + $0xf0] sm:$0xf] %v362
  %383 = vst [vmem:[#allocation2 + $0xf8] sm:$0xf] %v361
  %384 = vst [vmem:[#allocation2 + $0x100] sm:$0xf] %v360
  %385 = vst [vmem:[#allocation2 + $0x108] sm:$0xf] %v359
  %386 = vst [vmem:[#allocation2 + $0x110] sm:$0xf] %v358
  %387 = vst [vmem:[#allocation2 + $0x118] sm:$0xf] %v363
  %v394 = vrot.slane %v380, 4
  %v395 = vrot.slane %v379, 4
  %v396 = vrot.slane %v378, 4
  %v397 = vrot.slane %v377, 4
  %v398 = vrot.slane %v376, 4
  %v399 = vrot.slane %v381, 4
  %406 = vst [vmem:[#allocation2 + $0xf0] sm:$0xf0] %v394
  %407 = vst [vmem:[#allocation2 + $0xf8] sm:$0xf0] %v395
  %408 = vst [vmem:[#allocation2 + $0x100] sm:$0xf0] %v396
  %409 = vst [vmem:[#allocation2 + $0x108] sm:$0xf0] %v397
  %410 = vst [vmem:[#allocation2 + $0x110] sm:$0xf0] %v398
  %411 = vst [vmem:[#allocation2 + $0x118] sm:$0xf0] %v399
  %412 = vrot.lane.b32.xlu0 %v32, 111
  %v413 = vpop.permute.xlu0 %412
  %414 = vrot.lane.b32.xlu0 %v42, 111
  %v415 = vpop.permute.xlu0 %414
  %416 = vrot.lane.b32.xlu0 %v33, 111
  %v417 = vpop.permute.xlu0 %416
  %418 = vrot.lane.b32.xlu0 %v43, 111
  %v419 = vpop.permute.xlu0 %418
  %420 = vrot.lane.b32.xlu0 %v34, 111
  %v421 = vpop.permute.xlu0 %420
  %422 = vrot.lane.b32.xlu0 %v44, 111
  %v423 = vpop.permute.xlu0 %422
  %vm424 = vcmp.lt.s32.totalorder %v61, 111
  %v425 = vsel %vm424, %v421, %v423
  %v426 = vsel %vm424, %v419, %v421
  %v427 = vsel %vm424, %v417, %v419
  %v428 = vsel %vm424, %v415, %v417
  %v429 = vsel %vm424, %v413, %v415
  %v430 = vsel %vm424, %v423, %v413
  %431 = vrot.lane.b32.xlu0 %v35, 111
  %v432 = vpop.permute.xlu0 %431
  %433 = vrot.lane.b32.xlu0 %v72, 111
  %v434 = vpop.permute.xlu0 %433
  %435 = vrot.lane.b32.xlu0 %v36, 111
  %v436 = vpop.permute.xlu0 %435
  %437 = vrot.lane.b32.xlu0 %v73, 111
  %v438 = vpop.permute.xlu0 %437
  %439 = vrot.lane.b32.xlu0 %v37, 111
  %v440 = vpop.permute.xlu0 %439
  %441 = vrot.lane.b32.xlu0 %v74, 111
  %v442 = vpop.permute.xlu0 %441
  %v443 = vsel %vm424, %v440, %v442
  %v444 = vsel %vm424, %v438, %v440
  %v445 = vsel %vm424, %v436, %v438
  %v446 = vsel %vm424, %v434, %v436
  %v447 = vsel %vm424, %v432, %v434
  %v448 = vsel %vm424, %v442, %v432
  %449 = vst [vmem:[#allocation2 + $0x120] sm:$0xf] %v429
  %450 = vst [vmem:[#allocation2 + $0x128] sm:$0xf] %v428
  %451 = vst [vmem:[#allocation2 + $0x130] sm:$0xf] %v427
  %452 = vst [vmem:[#allocation2 + $0x138] sm:$0xf] %v426
  %453 = vst [vmem:[#allocation2 + $0x140] sm:$0xf] %v425
  %454 = vst [vmem:[#allocation2 + $0x148] sm:$0xf] %v430
  %v461 = vrot.slane %v447, 4
  %v462 = vrot.slane %v446, 4
  %v463 = vrot.slane %v445, 4
  %v464 = vrot.slane %v444, 4
  %v465 = vrot.slane %v443, 4
  %v466 = vrot.slane %v448, 4
  %473 = vst [vmem:[#allocation2 + $0x120] sm:$0xf0] %v461
  %474 = vst [vmem:[#allocation2 + $0x128] sm:$0xf0] %v462
  %475 = vst [vmem:[#allocation2 + $0x130] sm:$0xf0] %v463
  %476 = vst [vmem:[#allocation2 + $0x138] sm:$0xf0] %v464
  %477 = vst [vmem:[#allocation2 + $0x140] sm:$0xf0] %v465
  %478 = vst [vmem:[#allocation2 + $0x148] sm:$0xf0] %v466
  %479 = vrot.lane.b32.xlu0 %v32, 110
  %v480 = vpop.permute.xlu0 %479
  %481 = vrot.lane.b32.xlu0 %v42, 110
  %v482 = vpop.permute.xlu0 %481
  %483 = vrot.lane.b32.xlu0 %v33, 110
  %v484 = vpop.permute.xlu0 %483
  %485 = vrot.lane.b32.xlu0 %v43, 110
  %v486 = vpop.permute.xlu0 %485
  %487 = vrot.lane.b32.xlu0 %v34, 110
  %v488 = vpop.permute.xlu0 %487
  %489 = vrot.lane.b32.xlu0 %v44, 110
  %v490 = vpop.permute.xlu0 %489
  %vm491 = vcmp.lt.s32.totalorder %v61, 110
  %v492 = vsel %vm491, %v488, %v490
  %v493 = vsel %vm491, %v486, %v488
  %v494 = vsel %vm491, %v484, %v486
  %v495 = vsel %vm491, %v482, %v484
  %v496 = vsel %vm491, %v480, %v482
  %v497 = vsel %vm491, %v490, %v480
  %498 = vrot.lane.b32.xlu0 %v35, 110
  %v499 = vpop.permute.xlu0 %498
  %500 = vrot.lane.b32.xlu0 %v72, 110
  %v501 = vpop.permute.xlu0 %500
  %502 = vrot.lane.b32.xlu0 %v36, 110
  %v503 = vpop.permute.xlu0 %502
  %504 = vrot.lane.b32.xlu0 %v73, 110
  %v505 = vpop.permute.xlu0 %504
  %506 = vrot.lane.b32.xlu0 %v37, 110
  %v507 = vpop.permute.xlu0 %506
  %508 = vrot.lane.b32.xlu0 %v74, 110
  %v509 = vpop.permute.xlu0 %508
  %v510 = vsel %vm491, %v507, %v509
  %v511 = vsel %vm491, %v505, %v507
  %v512 = vsel %vm491, %v503, %v505
  %v513 = vsel %vm491, %v501, %v503
  %v514 = vsel %vm491, %v499, %v501
  %v515 = vsel %vm491, %v509, %v499
  %516 = vst [vmem:[#allocation2 + $0x150] sm:$0xf] %v496
  %517 = vst [vmem:[#allocation2 + $0x158] sm:$0xf] %v495
  %518 = vst [vmem:[#allocation2 + $0x160] sm:$0xf] %v494
  %519 = vst [vmem:[#allocation2 + $0x168] sm:$0xf] %v493
  %520 = vst [vmem:[#allocation2 + $0x170] sm:$0xf] %v492
  %521 = vst [vmem:[#allocation2 + $0x178] sm:$0xf] %v497
  %v528 = vrot.slane %v514, 4
  %v529 = vrot.slane %v513, 4
  %v530 = vrot.slane %v512, 4
  %v531 = vrot.slane %v511, 4
  %v532 = vrot.slane %v510, 4
  %v533 = vrot.slane %v515, 4
  %540 = vst [vmem:[#allocation2 + $0x150] sm:$0xf0] %v528
  %541 = vst [vmem:[#allocation2 + $0x158] sm:$0xf0] %v529
  %542 = vst [vmem:[#allocation2 + $0x160] sm:$0xf0] %v530
  %543 = vst [vmem:[#allocation2 + $0x168] sm:$0xf0] %v531
  %544 = vst [vmem:[#allocation2 + $0x170] sm:$0xf0] %v532
  %545 = vst [vmem:[#allocation2 + $0x178] sm:$0xf0] %v533
  %546 = vrot.lane.b32.xlu0 %v32, 109
  %v547 = vpop.permute.xlu0 %546
  %548 = vrot.lane.b32.xlu0 %v42, 109
  %v549 = vpop.permute.xlu0 %548
  %550 = vrot.lane.b32.xlu0 %v33, 109
  %v551 = vpop.permute.xlu0 %550
  %552 = vrot.lane.b32.xlu0 %v43, 109
  %v553 = vpop.permute.xlu0 %552
  %554 = vrot.lane.b32.xlu0 %v34, 109
  %v555 = vpop.permute.xlu0 %554
  %556 = vrot.lane.b32.xlu0 %v44, 109
  %v557 = vpop.permute.xlu0 %556
  %vm558 = vcmp.lt.s32.totalorder %v61, 109
  %v559 = vsel %vm558, %v555, %v557
  %v560 = vsel %vm558, %v553, %v555
  %v561 = vsel %vm558, %v551, %v553
  %v562 = vsel %vm558, %v549, %v551
  %v563 = vsel %vm558, %v547, %v549
  %v564 = vsel %vm558, %v557, %v547
  %565 = vrot.lane.b32.xlu0 %v35, 109
  %v566 = vpop.permute.xlu0 %565
  %567 = vrot.lane.b32.xlu0 %v72, 109
  %v568 = vpop.permute.xlu0 %567
  %569 = vrot.lane.b32.xlu0 %v36, 109
  %v570 = vpop.permute.xlu0 %569
  %571 = vrot.lane.b32.xlu0 %v73, 109
  %v572 = vpop.permute.xlu0 %571
  %573 = vrot.lane.b32.xlu0 %v37, 109
  %v574 = vpop.permute.xlu0 %573
  %575 = vrot.lane.b32.xlu0 %v74, 109
  %v576 = vpop.permute.xlu0 %575
  %v577 = vsel %vm558, %v574, %v576
  %v578 = vsel %vm558, %v572, %v574
  %v579 = vsel %vm558, %v570, %v572
  %v580 = vsel %vm558, %v568, %v570
  %v581 = vsel %vm558, %v566, %v568
  %v582 = vsel %vm558, %v576, %v566
  %583 = vst [vmem:[#allocation2 + $0x180] sm:$0xf] %v563
  %584 = vst [vmem:[#allocation2 + $0x188] sm:$0xf] %v562
  %585 = vst [vmem:[#allocation2 + $0x190] sm:$0xf] %v561
  %586 = vst [vmem:[#allocation2 + $0x198] sm:$0xf] %v560
  %587 = vst [vmem:[#allocation2 + $0x1a0] sm:$0xf] %v559
  %588 = vst [vmem:[#allocation2 + $0x1a8] sm:$0xf] %v564
  %v595 = vrot.slane %v581, 4
  %v596 = vrot.slane %v580, 4
  %v597 = vrot.slane %v579, 4
  %v598 = vrot.slane %v578, 4
  %v599 = vrot.slane %v577, 4
  %v600 = vrot.slane %v582, 4
  %607 = vst [vmem:[#allocation2 + $0x180] sm:$0xf0] %v595
  %608 = vst [vmem:[#allocation2 + $0x188] sm:$0xf0] %v596
  %609 = vst [vmem:[#allocation2 + $0x190] sm:$0xf0] %v597
  %610 = vst [vmem:[#allocation2 + $0x198] sm:$0xf0] %v598
  %611 = vst [vmem:[#allocation2 + $0x1a0] sm:$0xf0] %v599
  %612 = vst [vmem:[#allocation2 + $0x1a8] sm:$0xf0] %v600
  %v613 = vld [vmem:[%s3] sm:$0xf]
  %v614 = vld [vmem:[#allocation2] sm:$0xff]
  %v615 = vld [vmem:[#allocation2 + $0x8] sm:$0xff]
  %v616 = vld [vmem:[#allocation2 + $0x10] sm:$0xff]
  %v617 = vld [vmem:[#allocation2 + $0x18] sm:$0xff]
  %v618 = vld [vmem:[#allocation2 + $0x20] sm:$0xff]
  %v619 = vld [vmem:[#allocation2 + $0x28] sm:$0xff]
  %v620 = vld [vmem:[#allocation2 + $0x30] sm:$0xff]
  %v621 = vld [vmem:[#allocation2 + $0x38] sm:$0xff]
  %v622 = vld [vmem:[#allocation2 + $0x40] sm:$0xff]
  %v623 = vld [vmem:[#allocation2 + $0x48] sm:$0xff]
  %v624 = vld [vmem:[#allocation2 + $0x50] sm:$0xff]
  %v625 = vld [vmem:[#allocation2 + $0x58] sm:$0xff]
  %v626 = vld [vmem:[#allocation2 + $0x60] sm:$0xff]
  %v627 = vld [vmem:[#allocation2 + $0x68] sm:$0xff]
  %v628 = vld [vmem:[#allocation2 + $0x70] sm:$0xff]
  %v629 = vld [vmem:[#allocation2 + $0x78] sm:$0xff]
  %v630 = vld [vmem:[#allocation2 + $0x80] sm:$0xff]
  %v631 = vld [vmem:[#allocation2 + $0x88] sm:$0xff]
  %v632 = vld [vmem:[#allocation2 + $0x90] sm:$0xff]
  %v633 = vld [vmem:[#allocation2 + $0x98] sm:$0xff]
  %v634 = vld [vmem:[#allocation2 + $0xa0] sm:$0xff]
  %v635 = vld [vmem:[#allocation2 + $0xa8] sm:$0xff]
  %v636 = vld [vmem:[#allocation2 + $0xb0] sm:$0xff]
  %v637 = vld [vmem:[#allocation2 + $0xb8] sm:$0xff]
  %v638 = vld [vmem:[#allocation2 + $0xc0] sm:$0xff]
  %v639 = vld [vmem:[#allocation2 + $0xc8] sm:$0xff]
  %v640 = vld [vmem:[#allocation2 + $0xd0] sm:$0xff]
  %v641 = vld [vmem:[#allocation2 + $0xd8] sm:$0xff]
  %v642 = vld [vmem:[#allocation2 + $0xe0] sm:$0xff]
  %v643 = vld [vmem:[#allocation2 + $0xe8] sm:$0xff]
  %v644 = vld [vmem:[#allocation2 + $0xf0] sm:$0xff]
  %v645 = vld [vmem:[#allocation2 + $0xf8] sm:$0xff]
  %v646 = vld [vmem:[#allocation2 + $0x100] sm:$0xff]
  %v647 = vld [vmem:[#allocation2 + $0x108] sm:$0xff]
  %v648 = vld [vmem:[#allocation2 + $0x110] sm:$0xff]
  %v649 = vld [vmem:[#allocation2 + $0x118] sm:$0xff]
  %v650 = vld [vmem:[#allocation2 + $0x120] sm:$0xff]
  %v651 = vld [vmem:[#allocation2 + $0x128] sm:$0xff]
  %v652 = vld [vmem:[#allocation2 + $0x130] sm:$0xff]
  %v653 = vld [vmem:[#allocation2 + $0x138] sm:$0xff]
  %v654 = vld [vmem:[#allocation2 + $0x140] sm:$0xff]
  %v655 = vld [vmem:[#allocation2 + $0x148] sm:$0xff]
  %v656 = vld [vmem:[#allocation2 + $0x150] sm:$0xff]
  %v657 = vld [vmem:[#allocation2 + $0x158] sm:$0xff]
  %v658 = vld [vmem:[#allocation2 + $0x160] sm:$0xff]
  %v659 = vld [vmem:[#allocation2 + $0x168] sm:$0xff]
  %v660 = vld [vmem:[#allocation2 + $0x170] sm:$0xff]
  %v661 = vld [vmem:[#allocation2 + $0x178] sm:$0xff]
  %v662 = vld [vmem:[#allocation2 + $0x180] sm:$0xff]
  %v663 = vld [vmem:[#allocation2 + $0x188] sm:$0xff]
  %v664 = vld [vmem:[#allocation2 + $0x190] sm:$0xff]
  %v665 = vld [vmem:[#allocation2 + $0x198] sm:$0xff]
  %v666 = vld [vmem:[#allocation2 + $0x1a0] sm:$0xff]
  %v667 = vld [vmem:[#allocation2 + $0x1a8] sm:$0xff]
  %vm668 = vcmask 588800
  %v670 = vsel %vm668, %v613, 0
  %672 = vmatprep.subr.mxu0 %v615
  %673 = vmatpush1.msra.mxu0 %v614
  %674 = vmatprep.subr.mxu0 %v621
  %675 = vmatpush1.msra.mxu0 %v620
  %676 = vmatprep.subr.mxu0 %v627
  %677 = vmatpush1.msra.mxu0 %v626
  %678 = vmatprep.subr.mxu0 %v633
  %679 = vmatpush1.msra.mxu0 %v632
  %680 = vmatprep.subr.mxu0 %v639
  %681 = vmatpush1.msra.mxu0 %v638
  %682 = vmatprep.subr.mxu0 %v645
  %683 = vmatpush1.msra.mxu0 %v644
  %684 = vmatprep.subr.mxu0 %v651
  %685 = vmatpush1.msra.mxu0 %v650
  %686 = vmatprep.subr.mxu0 %v657
  %687 = vmatpush1.msra.mxu0 %v656
  %688 = vmatprep.subr.mxu0 %v663
  %689 = vmatpush1.msra.mxu0 %v662
  %690 = vmatprep.subr.mxu0 0.0
  %691 = vmatpush1.msra.mxu0 0.0
  %692 = vmatprep.subr.mxu0 0.0
  %693 = vmatpush1.msra.mxu0 0.0
  %694 = vmatprep.subr.mxu0 0.0
  %695 = vmatpush1.msra.mxu0 0.0
  %696 = vmatprep.subr.mxu0 0.0
  %697 = vmatpush1.msra.mxu0 0.0
  %698 = vmatprep.subr.mxu0 0.0
  %699 = vmatpush1.msra.mxu0 0.0
  %700 = vmatprep.subr.mxu0 0.0
  %701 = vmatpush1.msra.mxu0 0.0
  %702 = vmatprep.subr.mxu0 0.0
  %703 = vmatpush1.msra.mxu0 0.0
  %704 = vmatprep.subr.mxu0 0.0
  %705 = vmatpush1.msra.mxu0 0.0
  %706 = vmatprep.subr.mxu0 0.0
  %707 = vmatpush1.msra.mxu0 0.0
  %708 = vmatprep.subr.mxu0 0.0
  %709 = vmatpush1.msra.mxu0 0.0
  %710 = vmatprep.subr.mxu0 0.0
  %711 = vmatpush1.msra.mxu0 0.0
  %712 = vmatprep.subr.mxu0 0.0
  %713 = vmatpush1.msra.mxu0 0.0
  %714 = vmatprep.subr.mxu0 0.0
  %715 = vmatpush1.msra.mxu0 0.0
  %716 = vmatprep.subr.mxu0 0.0
  %717 = vmatpush1.msra.mxu0 0.0
  %718 = vmatprep.subr.mxu0 0.0
  %719 = vmatpush1.msra.mxu0 0.0
  %720 = vmatprep.subr.mxu0 0.0
  %721 = vmatpush1.msra.mxu0 0.0
  %722 = vmatprep.subr.mxu0 0.0
  %723 = vmatpush1.msra.mxu0 0.0
  %724 = vmatprep.subr.mxu0 0.0
  %725 = vmatpush1.msra.mxu0 0.0
  %726 = vmatprep.subr.mxu0 0.0
  %727 = vmatpush1.msra.mxu0 0.0
  %728 = vmatprep.subr.mxu0 0.0
  %729 = vmatpush1.msra.mxu0 0.0
  %730 = vmatprep.subr.mxu0 0.0
  %731 = vmatpush1.msra.mxu0 0.0
  %732 = vmatprep.subr.mxu0 0.0
  %733 = vmatpush1.msra.mxu0 0.0
  %734 = vmatprep.subr.mxu0 0.0
  %735 = vmatpush1.msra.mxu0 0.0
  %736 = vmatprep.mubr.f32.mxu0 0.0
  %737 = vmatmul.mubr.f32.gmra.mrb[0].mxu0 %v670
  %v738 = vpop.f32.mrb[0].mxu0
  %v739 = vadd.f32 0.0, %v738
  %v740 = vpop.f32.mrb[0].mxu0
  %v741 = vadd.f32 0.0, %v740
  %742 = vdwg.mxu0
  %743 = vmatprep.subr.mxu0 %v617
  %744 = vmatpush1.msra.mxu0 %v616
  %745 = vmatprep.subr.mxu0 %v623
  %746 = vmatpush1.msra.mxu0 %v622
  %747 = vmatprep.subr.mxu0 %v629
  %748 = vmatpush1.msra.mxu0 %v628
  %749 = vmatprep.subr.mxu0 %v635
  %750 = vmatpush1.msra.mxu0 %v634
  %751 = vmatprep.subr.mxu0 %v641
  %752 = vmatpush1.msra.mxu0 %v640
  %753 = vmatprep.subr.mxu0 %v647
  %754 = vmatpush1.msra.mxu0 %v646
  %755 = vmatprep.subr.mxu0 %v653
  %756 = vmatpush1.msra.mxu0 %v652
  %757 = vmatprep.subr.mxu0 %v659
  %758 = vmatpush1.msra.mxu0 %v658
  %759 = vmatprep.subr.mxu0 %v665
  %760 = vmatpush1.msra.mxu0 %v664
  %761 = vmatprep.subr.mxu0 0.0
  %762 = vmatpush1.msra.mxu0 0.0
  %763 = vmatprep.subr.mxu0 0.0
  %764 = vmatpush1.msra.mxu0 0.0
  %765 = vmatprep.subr.mxu0 0.0
  %766 = vmatpush1.msra.mxu0 0.0
  %767 = vmatprep.subr.mxu0 0.0
  %768 = vmatpush1.msra.mxu0 0.0
  %769 = vmatprep.subr.mxu0 0.0
  %770 = vmatpush1.msra.mxu0 0.0
  %771 = vmatprep.subr.mxu0 0.0
  %772 = vmatpush1.msra.mxu0 0.0
  %773 = vmatprep.subr.mxu0 0.0
  %774 = vmatpush1.msra.mxu0 0.0
  %775 = vmatprep.subr.mxu0 0.0
  %776 = vmatpush1.msra.mxu0 0.0
  %777 = vmatprep.subr.mxu0 0.0
  %778 = vmatpush1.msra.mxu0 0.0
  %779 = vmatprep.subr.mxu0 0.0
  %780 = vmatpush1.msra.mxu0 0.0
  %781 = vmatprep.subr.mxu0 0.0
  %782 = vmatpush1.msra.mxu0 0.0
  %783 = vmatprep.subr.mxu0 0.0
  %784 = vmatpush1.msra.mxu0 0.0
  %785 = vmatprep.subr.mxu0 0.0
  %786 = vmatpush1.msra.mxu0 0.0
  %787 = vmatprep.subr.mxu0 0.0
  %788 = vmatpush1.msra.mxu0 0.0
  %789 = vmatprep.subr.mxu0 0.0
  %790 = vmatpush1.msra.mxu0 0.0
  %791 = vmatprep.subr.mxu0 0.0
  %792 = vmatpush1.msra.mxu0 0.0
  %793 = vmatprep.subr.mxu0 0.0
  %794 = vmatpush1.msra.mxu0 0.0
  %795 = vmatprep.subr.mxu0 0.0
  %796 = vmatpush1.msra.mxu0 0.0
  %797 = vmatprep.subr.mxu0 0.0
  %798 = vmatpush1.msra.mxu0 0.0
  %799 = vmatprep.subr.mxu0 0.0
  %800 = vmatpush1.msra.mxu0 0.0
  %801 = vmatprep.subr.mxu0 0.0
  %802 = vmatpush1.msra.mxu0 0.0
  %803 = vmatprep.subr.mxu0 0.0
  %804 = vmatpush1.msra.mxu0 0.0
  %805 = vmatprep.subr.mxu0 0.0
  %806 = vmatpush1.msra.mxu0 0.0
  %807 = vmatprep.mubr.f32.mxu0 0.0
  %808 = vmatmul.mubr.f32.gmra.mrb[0].mxu0 %v670
  %v809 = vpop.f32.mrb[0].mxu0
  %v810 = vadd.f32 0.0, %v809
  %v811 = vpop.f32.mrb[0].mxu0
  %v812 = vadd.f32 0.0, %v811
  %813 = vdwg.mxu0
  %814 = vmatprep.subr.mxu0 %v619
  %815 = vmatpush1.msra.mxu0 %v618
  %816 = vmatprep.subr.mxu0 %v625
  %817 = vmatpush1.msra.mxu0 %v624
  %818 = vmatprep.subr.mxu0 %v631
  %819 = vmatpush1.msra.mxu0 %v630
  %820 = vmatprep.subr.mxu0 %v637
  %821 = vmatpush1.msra.mxu0 %v636
  %822 = vmatprep.subr.mxu0 %v643
  %823 = vmatpush1.msra.mxu0 %v642
  %824 = vmatprep.subr.mxu0 %v649
  %825 = vmatpush1.msra.mxu0 %v648
  %826 = vmatprep.subr.mxu0 %v655
  %827 = vmatpush1.msra.mxu0 %v654
  %828 = vmatprep.subr.mxu0 %v661
  %829 = vmatpush1.msra.mxu0 %v660
  %830 = vmatprep.subr.mxu0 %v667
  %831 = vmatpush1.msra.mxu0 %v666
  %832 = vmatprep.subr.mxu0 0.0
  %833 = vmatpush1.msra.mxu0 0.0
  %834 = vmatprep.subr.mxu0 0.0
  %835 = vmatpush1.msra.mxu0 0.0
  %836 = vmatprep.subr.mxu0 0.0
  %837 = vmatpush1.msra.mxu0 0.0
  %838 = vmatprep.subr.mxu0 0.0
  %839 = vmatpush1.msra.mxu0 0.0
  %840 = vmatprep.subr.mxu0 0.0
  %841 = vmatpush1.msra.mxu0 0.0
  %842 = vmatprep.subr.mxu0 0.0
  %843 = vmatpush1.msra.mxu0 0.0
  %844 = vmatprep.subr.mxu0 0.0
  %845 = vmatpush1.msra.mxu0 0.0
  %846 = vmatprep.subr.mxu0 0.0
  %847 = vmatpush1.msra.mxu0 0.0
  %848 = vmatprep.subr.mxu0 0.0
  %849 = vmatpush1.msra.mxu0 0.0
  %850 = vmatprep.subr.mxu0 0.0
  %851 = vmatpush1.msra.mxu0 0.0
  %852 = vmatprep.subr.mxu0 0.0
  %853 = vmatpush1.msra.mxu0 0.0
  %854 = vmatprep.subr.mxu0 0.0
  %855 = vmatpush1.msra.mxu0 0.0
  %856 = vmatprep.subr.mxu0 0.0
  %857 = vmatpush1.msra.mxu0 0.0
  %858 = vmatprep.subr.mxu0 0.0
  %859 = vmatpush1.msra.mxu0 0.0
  %860 = vmatprep.subr.mxu0 0.0
  %861 = vmatpush1.msra.mxu0 0.0
  %862 = vmatprep.subr.mxu0 0.0
  %863 = vmatpush1.msra.mxu0 0.0
  %864 = vmatprep.subr.mxu0 0.0
  %865 = vmatpush1.msra.mxu0 0.0
  %866 = vmatprep.subr.mxu0 0.0
  %867 = vmatpush1.msra.mxu0 0.0
  %868 = vmatprep.subr.mxu0 0.0
  %869 = vmatpush1.msra.mxu0 0.0
  %870 = vmatprep.subr.mxu0 0.0
  %871 = vmatpush1.msra.mxu0 0.0
  %872 = vmatprep.subr.mxu0 0.0
  %873 = vmatpush1.msra.mxu0 0.0
  %874 = vmatprep.subr.mxu0 0.0
  %875 = vmatpush1.msra.mxu0 0.0
  %876 = vmatprep.subr.mxu0 0.0
  %877 = vmatpush1.msra.mxu0 0.0
  %878 = vmatprep.mubr.f32.mxu0 0.0
  %879 = vmatmul.mubr.f32.gmra.mrb[0].mxu0 %v670
  %v880 = vpop.f32.mrb[0].mxu0
  %v881 = vadd.f32 0.0, %v880
  %v882 = vpop.f32.mrb[0].mxu0
  %v883 = vadd.f32 0.0, %v882
  %884 = vdwg.mxu0
  %v886 = vlaneseq
  %v887 = vshrl.u32 %v886, 7
  %v888 = vsub.s32 0, %v887
  %v889 = vrot.slane %v38, %v888
  %v890 = vlaneseq
  %v891 = vshrl.u32 %v890, 7
  %v892 = vsub.s32 1, %v891
  %v893 = vrot.slane %v38, %v892
  %v894 = vlaneseq
  %v895 = vshrl.u32 %v894, 7
  %v896 = vsub.s32 2, %v895
  %v897 = vrot.slane %v38, %v896
  %v898 = vlaneseq
  %v899 = vshrl.u32 %v898, 7
  %v900 = vsub.s32 3, %v899
  %v901 = vrot.slane %v38, %v900
  %v902 = vlaneseq
  %v903 = vshrl.u32 %v902, 7
  %v904 = vsub.s32 4, %v903
  %v905 = vrot.slane %v38, %v904
  %v906 = vlaneseq
  %v907 = vshrl.u32 %v906, 7
  %v908 = vsub.s32 5, %v907
  %v909 = vrot.slane %v38, %v908
  %v916 = vmul.f32 %v739, %v889
  %v917 = vmul.f32 %v741, %v893
  %v918 = vmul.f32 %v810, %v897
  %v919 = vmul.f32 %v812, %v901
  %v920 = vmul.f32 %v881, %v905
  %v921 = vmul.f32 %v883, %v909
  %vm922 = vcmask 1043456
  %v923 = vsel %vm922, %v916, 0.0
  %v924 = vsel %vm922, %v917, 0.0
  %v925 = vadd.f32 %v923, %v924
  %v926 = vsel %vm922, %v918, 0.0
  %v927 = vadd.f32 %v925, %v926
  %v928 = vsel %vm922, %v919, 0.0
  %v929 = vadd.f32 %v927, %v928
  %v930 = vsel %vm922, %v920, 0.0
  %v931 = vadd.f32 %v929, %v930
  %v932 = vsel %vm922, %v921, 0.0
  %v933 = vadd.f32 %v931, %v932
  %934 = vadd.xlane.f32.xlu0 %v933
  %v935 = vpop.xlane.xlu0 %934
  %v936 = vmul.f32 %v739, %v739
  %v937 = vmul.f32 %v741, %v741
  %v938 = vmul.f32 %v810, %v810
  %v939 = vmul.f32 %v812, %v812
  %v940 = vmul.f32 %v881, %v881
  %v941 = vmul.f32 %v883, %v883
  %v942 = vmul.f32 %v936, %v889
  %v943 = vmul.f32 %v937, %v893
  %v944 = vmul.f32 %v938, %v897
  %v945 = vmul.f32 %v939, %v901
  %v946 = vmul.f32 %v940, %v905
  %v947 = vmul.f32 %v941, %v909
  %v948 = vsel %vm922, %v942, 0.0
  %v949 = vsel %vm922, %v943, 0.0
  %v950 = vadd.f32 %v948, %v949
  %v951 = vsel %vm922, %v944, 0.0
  %v952 = vadd.f32 %v950, %v951
  %v953 = vsel %vm922, %v945, 0.0
  %v954 = vadd.f32 %v952, %v953
  %v955 = vsel %vm922, %v946, 0.0
  %v956 = vadd.f32 %v954, %v955
  %v957 = vsel %vm922, %v947, 0.0
  %v958 = vadd.f32 %v956, %v957
  %959 = vadd.xlane.f32.xlu0 %v958
  %v960 = vpop.xlane.xlu0 %959
  %v961 = vmul.f32 %v935, 0.001953125
  %v962 = vmul.f32 %v960, 0.001953125
  %v963 = vmul.f32 %v961, %v961
  %v964 = vsub.f32 %v962, %v963
  %v965 = vmax.f32 %v964, 0.0
  %v966 = vld [vmem:[%s4] sm:$0xf]
  %v967 = vadd.f32 %v965, 1e-05
  %v968 = vrsqrt.pop %v967
  %v969 = vmul.f32 %v966, %v968
  %971 = vset.pattern.permute.xlu0 0
  %972 = vperm.xlu0 %971, %v969
  %v973 = vpop.permute.xlu0 %972
  %v975 = vmul.f32 %v739, %v973
  %v976 = vmul.f32 %v741, %v973
  %v977 = vmul.f32 %v810, %v973
  %v978 = vmul.f32 %v812, %v973
  %v979 = vmul.f32 %v881, %v973
  %v980 = vmul.f32 %v883, %v973
  %v981 = vld [vmem:[%s5] sm:$0xf]
  %v982 = vmul.f32 %v961, %v969
  %v983 = vsub.f32 %v981, %v982
  %985 = vset.pattern.permute.xlu0 0
  %986 = vperm.xlu0 %985, %v983
  %v987 = vpop.permute.xlu0 %986
  %v989 = vadd.f32 %v975, %v987
  %v990 = vadd.f32 %v976, %v987
  %v991 = vadd.f32 %v977, %v987
  %v992 = vadd.f32 %v978, %v987
  %v993 = vadd.f32 %v979, %v987
  %v994 = vadd.f32 %v980, %v987
  %v995 = vmax.f32 %v989, 0.0
  %v996 = vmax.f32 %v990, 0.0
  %v997 = vmax.f32 %v991, 0.0
  %v998 = vmax.f32 %v992, 0.0
  %v999 = vmax.f32 %v993, 0.0
  %v1000 = vmax.f32 %v994, 0.0
  %v1001 = vmul.f32 %v995, %v889
  %v1002 = vmul.f32 %v996, %v893
  %v1003 = vmul.f32 %v997, %v897
  %v1004 = vmul.f32 %v998, %v901
  %v1005 = vmul.f32 %v999, %v905
  %v1006 = vmul.f32 %v1000, %v909
  %1007 = vrot.lane.b32.xlu0 %v1001, 19
  %v1008 = vpop.permute.xlu0 %1007
  %1009 = vrot.lane.b32.xlu0 %v1002, 19
  %v1010 = vpop.permute.xlu0 %1009
  %1011 = vrot.lane.b32.xlu0 %v1003, 19
  %v1012 = vpop.permute.xlu0 %1011
  %1013 = vrot.lane.b32.xlu0 %v1004, 19
  %v1014 = vpop.permute.xlu0 %1013
  %1015 = vrot.lane.b32.xlu0 %v1005, 19
  %v1016 = vpop.permute.xlu0 %1015
  %1017 = vrot.lane.b32.xlu0 %v1006, 19
  %v1018 = vpop.permute.xlu0 %1017
  %v1019 = vsel %vm62, %v1016, %v1018
  %v1020 = vsel %vm62, %v1014, %v1016
  %v1021 = vsel %vm62, %v1012, %v1014
  %v1022 = vsel %vm62, %v1010, %v1012
  %v1023 = vsel %vm62, %v1008, %v1010
  %v1024 = vsel %vm62, %v1018, %v1008
  %1025 = vst [vmem:[#allocation3] sm:$0xf] %v1024
  %1026 = vst [vmem:[#allocation3 + $0x8] sm:$0xf] %v1023
  %1027 = vst [vmem:[#allocation3 + $0x10] sm:$0xf] %v1022
  %1028 = vst [vmem:[#allocation3 + $0x18] sm:$0xf] %v1021
  %1029 = vst [vmem:[#allocation3 + $0x20] sm:$0xf] %v1020
  %1030 = vst [vmem:[#allocation3 + $0x28] sm:$0xf] %v1019
  %1031 = vrot.lane.b32.xlu0 %v1001, 18
  %v1032 = vpop.permute.xlu0 %1031
  %1033 = vrot.lane.b32.xlu0 %v1002, 18
  %v1034 = vpop.permute.xlu0 %1033
  %1035 = vrot.lane.b32.xlu0 %v1003, 18
  %v1036 = vpop.permute.xlu0 %1035
  %1037 = vrot.lane.b32.xlu0 %v1004, 18
  %v1038 = vpop.permute.xlu0 %1037
  %1039 = vrot.lane.b32.xlu0 %v1005, 18
  %v1040 = vpop.permute.xlu0 %1039
  %1041 = vrot.lane.b32.xlu0 %v1006, 18
  %v1042 = vpop.permute.xlu0 %1041
  %v1043 = vsel %vm138, %v1040, %v1042
  %v1044 = vsel %vm138, %v1038, %v1040
  %v1045 = vsel %vm138, %v1036, %v1038
  %v1046 = vsel %vm138, %v1034, %v1036
  %v1047 = vsel %vm138, %v1032, %v1034
  %v1048 = vsel %vm138, %v1042, %v1032
  %v1055 = vrot.slane %v1048, 4
  %v1056 = vrot.slane %v1047, 4
  %v1057 = vrot.slane %v1046, 4
  %v1058 = vrot.slane %v1045, 4
  %v1059 = vrot.slane %v1044, 4
  %v1060 = vrot.slane %v1043, 4
  %1067 = vst [vmem:[#allocation3] sm:$0xf0] %v1055
  %1068 = vst [vmem:[#allocation3 + $0x8] sm:$0xf0] %v1056
  %1069 = vst [vmem:[#allocation3 + $0x10] sm:$0xf0] %v1057
  %1070 = vst [vmem:[#allocation3 + $0x18] sm:$0xf0] %v1058
  %1071 = vst [vmem:[#allocation3 + $0x20] sm:$0xf0] %v1059
  %1072 = vst [vmem:[#allocation3 + $0x28] sm:$0xf0] %v1060
  %1073 = vrot.lane.b32.xlu0 %v1001, 17
  %v1074 = vpop.permute.xlu0 %1073
  %1075 = vrot.lane.b32.xlu0 %v1002, 17
  %v1076 = vpop.permute.xlu0 %1075
  %1077 = vrot.lane.b32.xlu0 %v1003, 17
  %v1078 = vpop.permute.xlu0 %1077
  %1079 = vrot.lane.b32.xlu0 %v1004, 17
  %v1080 = vpop.permute.xlu0 %1079
  %1081 = vrot.lane.b32.xlu0 %v1005, 17
  %v1082 = vpop.permute.xlu0 %1081
  %1083 = vrot.lane.b32.xlu0 %v1006, 17
  %v1084 = vpop.permute.xlu0 %1083
  %v1085 = vsel %vm205, %v1082, %v1084
  %v1086 = vsel %vm205, %v1080, %v1082
  %v1087 = vsel %vm205, %v1078, %v1080
  %v1088 = vsel %vm205, %v1076, %v1078
  %v1089 = vsel %vm205, %v1074, %v1076
  %v1090 = vsel %vm205, %v1084, %v1074
  %1091 = vst [vmem:[#allocation3 + $0x30] sm:$0xf] %v1090
  %1092 = vst [vmem:[#allocation3 + $0x38] sm:$0xf] %v1089
  %1093 = vst [vmem:[#allocation3 + $0x40] sm:$0xf] %v1088
  %1094 = vst [vmem:[#allocation3 + $0x48] sm:$0xf] %v1087
  %1095 = vst [vmem:[#allocation3 + $0x50] sm:$0xf] %v1086
  %1096 = vst [vmem:[#allocation3 + $0x58] sm:$0xf] %v1085
  %1097 = vrot.lane.b32.xlu0 %v1001, 1
  %v1098 = vpop.permute.xlu0 %1097
  %1099 = vrot.lane.b32.xlu0 %v1002, 1
  %v1100 = vpop.permute.xlu0 %1099
  %1101 = vrot.lane.b32.xlu0 %v1003, 1
  %v1102 = vpop.permute.xlu0 %1101
  %1103 = vrot.lane.b32.xlu0 %v1004, 1
  %v1104 = vpop.permute.xlu0 %1103
  %1105 = vrot.lane.b32.xlu0 %v1005, 1
  %v1106 = vpop.permute.xlu0 %1105
  %1107 = vrot.lane.b32.xlu0 %v1006, 1
  %v1108 = vpop.permute.xlu0 %1107
  %v1109 = vsel %vm272, %v1106, %v1108
  %v1110 = vsel %vm272, %v1104, %v1106
  %v1111 = vsel %vm272, %v1102, %v1104
  %v1112 = vsel %vm272, %v1100, %v1102
  %v1113 = vsel %vm272, %v1098, %v1100
  %v1114 = vsel %vm272, %v1108, %v1098
  %v1121 = vrot.slane %v1114, 4
  %v1122 = vrot.slane %v1113, 4
  %v1123 = vrot.slane %v1112, 4
  %v1124 = vrot.slane %v1111, 4
  %v1125 = vrot.slane %v1110, 4
  %v1126 = vrot.slane %v1109, 4
  %1133 = vst [vmem:[#allocation3 + $0x30] sm:$0xf0] %v1121
  %1134 = vst [vmem:[#allocation3 + $0x38] sm:$0xf0] %v1122
  %1135 = vst [vmem:[#allocation3 + $0x40] sm:$0xf0] %v1123
  %1136 = vst [vmem:[#allocation3 + $0x48] sm:$0xf0] %v1124
  %1137 = vst [vmem:[#allocation3 + $0x50] sm:$0xf0] %v1125
  %1138 = vst [vmem:[#allocation3 + $0x58] sm:$0xf0] %v1126
  %1139 = vst [vmem:[#allocation3 + $0x60] sm:$0xf] %v1001
  %1140 = vst [vmem:[#allocation3 + $0x68] sm:$0xf] %v1002
  %1141 = vst [vmem:[#allocation3 + $0x70] sm:$0xf] %v1003
  %1142 = vst [vmem:[#allocation3 + $0x78] sm:$0xf] %v1004
  %1143 = vst [vmem:[#allocation3 + $0x80] sm:$0xf] %v1005
  %1144 = vst [vmem:[#allocation3 + $0x88] sm:$0xf] %v1006
  %1145 = vrot.lane.b32.xlu0 %v1001, 127
  %v1146 = vpop.permute.xlu0 %1145
  %1147 = vrot.lane.b32.xlu0 %v1002, 127
  %v1148 = vpop.permute.xlu0 %1147
  %1149 = vrot.lane.b32.xlu0 %v1003, 127
  %v1150 = vpop.permute.xlu0 %1149
  %1151 = vrot.lane.b32.xlu0 %v1004, 127
  %v1152 = vpop.permute.xlu0 %1151
  %1153 = vrot.lane.b32.xlu0 %v1005, 127
  %v1154 = vpop.permute.xlu0 %1153
  %1155 = vrot.lane.b32.xlu0 %v1006, 127
  %v1156 = vpop.permute.xlu0 %1155
  %v1157 = vsel %vm357, %v1154, %v1156
  %v1158 = vsel %vm357, %v1152, %v1154
  %v1159 = vsel %vm357, %v1150, %v1152
  %v1160 = vsel %vm357, %v1148, %v1150
  %v1161 = vsel %vm357, %v1146, %v1148
  %v1162 = vsel %vm357, %v1156, %v1146
  %v1169 = vrot.slane %v1161, 4
  %v1170 = vrot.slane %v1160, 4
  %v1171 = vrot.slane %v1159, 4
  %v1172 = vrot.slane %v1158, 4
  %v1173 = vrot.slane %v1157, 4
  %v1174 = vrot.slane %v1162, 4
  %1181 = vst [vmem:[#allocation3 + $0x60] sm:$0xf0] %v1169
  %1182 = vst [vmem:[#allocation3 + $0x68] sm:$0xf0] %v1170
  %1183 = vst [vmem:[#allocation3 + $0x70] sm:$0xf0] %v1171
  %1184 = vst [vmem:[#allocation3 + $0x78] sm:$0xf0] %v1172
  %1185 = vst [vmem:[#allocation3 + $0x80] sm:$0xf0] %v1173
  %1186 = vst [vmem:[#allocation3 + $0x88] sm:$0xf0] %v1174
  %1187 = vrot.lane.b32.xlu0 %v1001, 111
  %v1188 = vpop.permute.xlu0 %1187
  %1189 = vrot.lane.b32.xlu0 %v1002, 111
  %v1190 = vpop.permute.xlu0 %1189
  %1191 = vrot.lane.b32.xlu0 %v1003, 111
  %v1192 = vpop.permute.xlu0 %1191
  %1193 = vrot.lane.b32.xlu0 %v1004, 111
  %v1194 = vpop.permute.xlu0 %1193
  %1195 = vrot.lane.b32.xlu0 %v1005, 111
  %v1196 = vpop.permute.xlu0 %1195
  %1197 = vrot.lane.b32.xlu0 %v1006, 111
  %v1198 = vpop.permute.xlu0 %1197
  %v1199 = vsel %vm424, %v1196, %v1198
  %v1200 = vsel %vm424, %v1194, %v1196
  %v1201 = vsel %vm424, %v1192, %v1194
  %v1202 = vsel %vm424, %v1190, %v1192
  %v1203 = vsel %vm424, %v1188, %v1190
  %v1204 = vsel %vm424, %v1198, %v1188
  %1205 = vst [vmem:[#allocation3 + $0x90] sm:$0xf] %v1203
  %1206 = vst [vmem:[#allocation3 + $0x98] sm:$0xf] %v1202
  %1207 = vst [vmem:[#allocation3 + $0xa0] sm:$0xf] %v1201
  %1208 = vst [vmem:[#allocation3 + $0xa8] sm:$0xf] %v1200
  %1209 = vst [vmem:[#allocation3 + $0xb0] sm:$0xf] %v1199
  %1210 = vst [vmem:[#allocation3 + $0xb8] sm:$0xf] %v1204
  %1211 = vrot.lane.b32.xlu0 %v1001, 110
  %v1212 = vpop.permute.xlu0 %1211
  %1213 = vrot.lane.b32.xlu0 %v1002, 110
  %v1214 = vpop.permute.xlu0 %1213
  %1215 = vrot.lane.b32.xlu0 %v1003, 110
  %v1216 = vpop.permute.xlu0 %1215
  %1217 = vrot.lane.b32.xlu0 %v1004, 110
  %v1218 = vpop.permute.xlu0 %1217
  %1219 = vrot.lane.b32.xlu0 %v1005, 110
  %v1220 = vpop.permute.xlu0 %1219
  %1221 = vrot.lane.b32.xlu0 %v1006, 110
  %v1222 = vpop.permute.xlu0 %1221
  %v1223 = vsel %vm491, %v1220, %v1222
  %v1224 = vsel %vm491, %v1218, %v1220
  %v1225 = vsel %vm491, %v1216, %v1218
  %v1226 = vsel %vm491, %v1214, %v1216
  %v1227 = vsel %vm491, %v1212, %v1214
  %v1228 = vsel %vm491, %v1222, %v1212
  %v1235 = vrot.slane %v1227, 4
  %v1236 = vrot.slane %v1226, 4
  %v1237 = vrot.slane %v1225, 4
  %v1238 = vrot.slane %v1224, 4
  %v1239 = vrot.slane %v1223, 4
  %v1240 = vrot.slane %v1228, 4
  %1247 = vst [vmem:[#allocation3 + $0x90] sm:$0xf0] %v1235
  %1248 = vst [vmem:[#allocation3 + $0x98] sm:$0xf0] %v1236
  %1249 = vst [vmem:[#allocation3 + $0xa0] sm:$0xf0] %v1237
  %1250 = vst [vmem:[#allocation3 + $0xa8] sm:$0xf0] %v1238
  %1251 = vst [vmem:[#allocation3 + $0xb0] sm:$0xf0] %v1239
  %1252 = vst [vmem:[#allocation3 + $0xb8] sm:$0xf0] %v1240
  %1253 = vrot.lane.b32.xlu0 %v1001, 109
  %v1254 = vpop.permute.xlu0 %1253
  %1255 = vrot.lane.b32.xlu0 %v1002, 109
  %v1256 = vpop.permute.xlu0 %1255
  %1257 = vrot.lane.b32.xlu0 %v1003, 109
  %v1258 = vpop.permute.xlu0 %1257
  %1259 = vrot.lane.b32.xlu0 %v1004, 109
  %v1260 = vpop.permute.xlu0 %1259
  %1261 = vrot.lane.b32.xlu0 %v1005, 109
  %v1262 = vpop.permute.xlu0 %1261
  %1263 = vrot.lane.b32.xlu0 %v1006, 109
  %v1264 = vpop.permute.xlu0 %1263
  %v1265 = vsel %vm558, %v1262, %v1264
  %v1266 = vsel %vm558, %v1260, %v1262
  %v1267 = vsel %vm558, %v1258, %v1260
  %v1268 = vsel %vm558, %v1256, %v1258
  %v1269 = vsel %vm558, %v1254, %v1256
  %v1270 = vsel %vm558, %v1264, %v1254
  %1271 = vst [vmem:[#allocation3 + $0xc0] sm:$0xf] %v1269
  %1272 = vst [vmem:[#allocation3 + $0xc8] sm:$0xf] %v1268
  %1273 = vst [vmem:[#allocation3 + $0xd0] sm:$0xf] %v1267
  %1274 = vst [vmem:[#allocation3 + $0xd8] sm:$0xf] %v1266
  %1275 = vst [vmem:[#allocation3 + $0xe0] sm:$0xf] %v1265
  %1276 = vst [vmem:[#allocation3 + $0xe8] sm:$0xf] %v1270
  %v1277 = vld [vmem:[%s6] sm:$0xf]
  %v1278 = vld [vmem:[#allocation3] sm:$0xff]
  %v1279 = vld [vmem:[#allocation3 + $0x8] sm:$0xff]
  %v1280 = vld [vmem:[#allocation3 + $0x10] sm:$0xff]
  %v1281 = vld [vmem:[#allocation3 + $0x18] sm:$0xff]
  %v1282 = vld [vmem:[#allocation3 + $0x20] sm:$0xff]
  %v1283 = vld [vmem:[#allocation3 + $0x28] sm:$0xff]
  %v1284 = vld [vmem:[#allocation3 + $0x30] sm:$0xff]
  %v1285 = vld [vmem:[#allocation3 + $0x38] sm:$0xff]
  %v1286 = vld [vmem:[#allocation3 + $0x40] sm:$0xff]
  %v1287 = vld [vmem:[#allocation3 + $0x48] sm:$0xff]
  %v1288 = vld [vmem:[#allocation3 + $0x50] sm:$0xff]
  %v1289 = vld [vmem:[#allocation3 + $0x58] sm:$0xff]
  %v1290 = vld [vmem:[#allocation3 + $0x60] sm:$0xff]
  %v1291 = vld [vmem:[#allocation3 + $0x68] sm:$0xff]
  %v1292 = vld [vmem:[#allocation3 + $0x70] sm:$0xff]
  %v1293 = vld [vmem:[#allocation3 + $0x78] sm:$0xff]
  %v1294 = vld [vmem:[#allocation3 + $0x80] sm:$0xff]
  %v1295 = vld [vmem:[#allocation3 + $0x88] sm:$0xff]
  %v1296 = vld [vmem:[#allocation3 + $0x90] sm:$0xff]
  %v1297 = vld [vmem:[#allocation3 + $0x98] sm:$0xff]
  %v1298 = vld [vmem:[#allocation3 + $0xa0] sm:$0xff]
  %v1299 = vld [vmem:[#allocation3 + $0xa8] sm:$0xff]
  %v1300 = vld [vmem:[#allocation3 + $0xb0] sm:$0xff]
  %v1301 = vld [vmem:[#allocation3 + $0xb8] sm:$0xff]
  %v1302 = vld [vmem:[#allocation3 + $0xc0] sm:$0xf]
  %v1303 = vld [vmem:[#allocation3 + $0xc8] sm:$0xf]
  %v1304 = vld [vmem:[#allocation3 + $0xd0] sm:$0xf]
  %v1305 = vld [vmem:[#allocation3 + $0xd8] sm:$0xf]
  %v1306 = vld [vmem:[#allocation3 + $0xe0] sm:$0xf]
  %v1307 = vld [vmem:[#allocation3 + $0xe8] sm:$0xf]
  %vm1308 = vcmask 293888
  %v1310 = vsel %vm1308, %v1277, 0
  %v1313 = vsel %vm922, %v1302, 0
  %v1316 = vsel %vm922, %v1303, 0
  %v1319 = vsel %vm922, %v1304, 0
  %v1322 = vsel %vm922, %v1305, 0
  %v1325 = vsel %vm922, %v1306, 0
  %v1328 = vsel %vm922, %v1307, 0
  %1330 = vmatprep.subr.mxu0 %v1279
  %1331 = vmatpush1.msra.mxu0 %v1278
  %1332 = vmatprep.subr.mxu0 %v1285
  %1333 = vmatpush1.msra.mxu0 %v1284
  %1334 = vmatprep.subr.mxu0 %v1291
  %1335 = vmatpush1.msra.mxu0 %v1290
  %1336 = vmatprep.subr.mxu0 %v1297
  %1337 = vmatpush1.msra.mxu0 %v1296
  %1338 = vmatprep.subr.mxu0 %v1316
  %1339 = vmatpush1.msra.mxu0 %v1313
  %1340 = vmatprep.subr.mxu0 0.0
  %1341 = vmatpush1.msra.mxu0 0.0
  %1342 = vmatprep.subr.mxu0 0.0
  %1343 = vmatpush1.msra.mxu0 0.0
  %1344 = vmatprep.subr.mxu0 0.0
  %1345 = vmatpush1.msra.mxu0 0.0
  %1346 = vmatprep.subr.mxu0 0.0
  %1347 = vmatpush1.msra.mxu0 0.0
  %1348 = vmatprep.subr.mxu0 0.0
  %1349 = vmatpush1.msra.mxu0 0.0
  %1350 = vmatprep.subr.mxu0 0.0
  %1351 = vmatpush1.msra.mxu0 0.0
  %1352 = vmatprep.subr.mxu0 0.0
  %1353 = vmatpush1.msra.mxu0 0.0
  %1354 = vmatprep.subr.mxu0 0.0
  %1355 = vmatpush1.msra.mxu0 0.0
  %1356 = vmatprep.subr.mxu0 0.0
  %1357 = vmatpush1.msra.mxu0 0.0
  %1358 = vmatprep.subr.mxu0 0.0
  %1359 = vmatpush1.msra.mxu0 0.0
  %1360 = vmatprep.subr.mxu0 0.0
  %1361 = vmatpush1.msra.mxu0 0.0
  %1362 = vmatprep.subr.mxu0 0.0
  %1363 = vmatpush1.msra.mxu0 0.0
  %1364 = vmatprep.subr.mxu0 0.0
  %1365 = vmatpush1.msra.mxu0 0.0
  %1366 = vmatprep.subr.mxu0 0.0
  %1367 = vmatpush1.msra.mxu0 0.0
  %1368 = vmatprep.subr.mxu0 0.0
  %1369 = vmatpush1.msra.mxu0 0.0
  %1370 = vmatprep.subr.mxu0 0.0
  %1371 = vmatpush1.msra.mxu0 0.0
  %1372 = vmatprep.subr.mxu0 0.0
  %1373 = vmatpush1.msra.mxu0 0.0
  %1374 = vmatprep.subr.mxu0 0.0
  %1375 = vmatpush1.msra.mxu0 0.0
  %1376 = vmatprep.subr.mxu0 0.0
  %1377 = vmatpush1.msra.mxu0 0.0
  %1378 = vmatprep.subr.mxu0 0.0
  %1379 = vmatpush1.msra.mxu0 0.0
  %1380 = vmatprep.subr.mxu0 0.0
  %1381 = vmatpush1.msra.mxu0 0.0
  %1382 = vmatprep.subr.mxu0 0.0
  %1383 = vmatpush1.msra.mxu0 0.0
  %1384 = vmatprep.subr.mxu0 0.0
  %1385 = vmatpush1.msra.mxu0 0.0
  %1386 = vmatprep.subr.mxu0 0.0
  %1387 = vmatpush1.msra.mxu0 0.0
  %1388 = vmatprep.subr.mxu0 0.0
  %1389 = vmatpush1.msra.mxu0 0.0
  %1390 = vmatprep.subr.mxu0 0.0
  %1391 = vmatpush1.msra.mxu0 0.0
  %1392 = vmatprep.subr.mxu0 0.0
  %1393 = vmatpush1.msra.mxu0 0.0
  %1394 = vmatprep.mubr.f32.mxu0 0.0
  %1395 = vmatmul.mubr.f32.gmra.mrb[0].mxu0 %v1310
  %v1396 = vpop.f32.mrb[0].mxu0
  %v1397 = vadd.f32 0.0, %v1396
  %v1398 = vpop.f32.mrb[0].mxu0
  %v1399 = vadd.f32 0.0, %v1398
  %1400 = vdwg.mxu0
  %1401 = vmatprep.subr.mxu0 %v1281
  %1402 = vmatpush1.msra.mxu0 %v1280
  %1403 = vmatprep.subr.mxu0 %v1287
  %1404 = vmatpush1.msra.mxu0 %v1286
  %1405 = vmatprep.subr.mxu0 %v1293
  %1406 = vmatpush1.msra.mxu0 %v1292
  %1407 = vmatprep.subr.mxu0 %v1299
  %1408 = vmatpush1.msra.mxu0 %v1298
  %1409 = vmatprep.subr.mxu0 %v1322
  %1410 = vmatpush1.msra.mxu0 %v1319
  %1411 = vmatprep.subr.mxu0 0.0
  %1412 = vmatpush1.msra.mxu0 0.0
  %1413 = vmatprep.subr.mxu0 0.0
  %1414 = vmatpush1.msra.mxu0 0.0
  %1415 = vmatprep.subr.mxu0 0.0
  %1416 = vmatpush1.msra.mxu0 0.0
  %1417 = vmatprep.subr.mxu0 0.0
  %1418 = vmatpush1.msra.mxu0 0.0
  %1419 = vmatprep.subr.mxu0 0.0
  %1420 = vmatpush1.msra.mxu0 0.0
  %1421 = vmatprep.subr.mxu0 0.0
  %1422 = vmatpush1.msra.mxu0 0.0
  %1423 = vmatprep.subr.mxu0 0.0
  %1424 = vmatpush1.msra.mxu0 0.0
  %1425 = vmatprep.subr.mxu0 0.0
  %1426 = vmatpush1.msra.mxu0 0.0
  %1427 = vmatprep.subr.mxu0 0.0
  %1428 = vmatpush1.msra.mxu0 0.0
  %1429 = vmatprep.subr.mxu0 0.0
  %1430 = vmatpush1.msra.mxu0 0.0
  %1431 = vmatprep.subr.mxu0 0.0
  %1432 = vmatpush1.msra.mxu0 0.0
  %1433 = vmatprep.subr.mxu0 0.0
  %1434 = vmatpush1.msra.mxu0 0.0
  %1435 = vmatprep.subr.mxu0 0.0
  %1436 = vmatpush1.msra.mxu0 0.0
  %1437 = vmatprep.subr.mxu0 0.0
  %1438 = vmatpush1.msra.mxu0 0.0
  %1439 = vmatprep.subr.mxu0 0.0
  %1440 = vmatpush1.msra.mxu0 0.0
  %1441 = vmatprep.subr.mxu0 0.0
  %1442 = vmatpush1.msra.mxu0 0.0
  %1443 = vmatprep.subr.mxu0 0.0
  %1444 = vmatpush1.msra.mxu0 0.0
  %1445 = vmatprep.subr.mxu0 0.0
  %1446 = vmatpush1.msra.mxu0 0.0
  %1447 = vmatprep.subr.mxu0 0.0
  %1448 = vmatpush1.msra.mxu0 0.0
  %1449 = vmatprep.subr.mxu0 0.0
  %1450 = vmatpush1.msra.mxu0 0.0
  %1451 = vmatprep.subr.mxu0 0.0
  %1452 = vmatpush1.msra.mxu0 0.0
  %1453 = vmatprep.subr.mxu0 0.0
  %1454 = vmatpush1.msra.mxu0 0.0
  %1455 = vmatprep.subr.mxu0 0.0
  %1456 = vmatpush1.msra.mxu0 0.0
  %1457 = vmatprep.subr.mxu0 0.0
  %1458 = vmatpush1.msra.mxu0 0.0
  %1459 = vmatprep.subr.mxu0 0.0
  %1460 = vmatpush1.msra.mxu0 0.0
  %1461 = vmatprep.subr.mxu0 0.0
  %1462 = vmatpush1.msra.mxu0 0.0
  %1463 = vmatprep.subr.mxu0 0.0
  %1464 = vmatpush1.msra.mxu0 0.0
  %1465 = vmatprep.mubr.f32.mxu0 0.0
  %1466 = vmatmul.mubr.f32.gmra.mrb[0].mxu0 %v1310
  %v1467 = vpop.f32.mrb[0].mxu0
  %v1468 = vadd.f32 0.0, %v1467
  %v1469 = vpop.f32.mrb[0].mxu0
  %v1470 = vadd.f32 0.0, %v1469
  %1471 = vdwg.mxu0
  %1472 = vmatprep.subr.mxu0 %v1283
  %1473 = vmatpush1.msra.mxu0 %v1282
  %1474 = vmatprep.subr.mxu0 %v1289
  %1475 = vmatpush1.msra.mxu0 %v1288
  %1476 = vmatprep.subr.mxu0 %v1295
  %1477 = vmatpush1.msra.mxu0 %v1294
  %1478 = vmatprep.subr.mxu0 %v1301
  %1479 = vmatpush1.msra.mxu0 %v1300
  %1480 = vmatprep.subr.mxu0 %v1328
  %1481 = vmatpush1.msra.mxu0 %v1325
  %1482 = vmatprep.subr.mxu0 0.0
  %1483 = vmatpush1.msra.mxu0 0.0
  %1484 = vmatprep.subr.mxu0 0.0
  %1485 = vmatpush1.msra.mxu0 0.0
  %1486 = vmatprep.subr.mxu0 0.0
  %1487 = vmatpush1.msra.mxu0 0.0
  %1488 = vmatprep.subr.mxu0 0.0
  %1489 = vmatpush1.msra.mxu0 0.0
  %1490 = vmatprep.subr.mxu0 0.0
  %1491 = vmatpush1.msra.mxu0 0.0
  %1492 = vmatprep.subr.mxu0 0.0
  %1493 = vmatpush1.msra.mxu0 0.0
  %1494 = vmatprep.subr.mxu0 0.0
  %1495 = vmatpush1.msra.mxu0 0.0
  %1496 = vmatprep.subr.mxu0 0.0
  %1497 = vmatpush1.msra.mxu0 0.0
  %1498 = vmatprep.subr.mxu0 0.0
  %1499 = vmatpush1.msra.mxu0 0.0
  %1500 = vmatprep.subr.mxu0 0.0
  %1501 = vmatpush1.msra.mxu0 0.0
  %1502 = vmatprep.subr.mxu0 0.0
  %1503 = vmatpush1.msra.mxu0 0.0
  %1504 = vmatprep.subr.mxu0 0.0
  %1505 = vmatpush1.msra.mxu0 0.0
  %1506 = vmatprep.subr.mxu0 0.0
  %1507 = vmatpush1.msra.mxu0 0.0
  %1508 = vmatprep.subr.mxu0 0.0
  %1509 = vmatpush1.msra.mxu0 0.0
  %1510 = vmatprep.subr.mxu0 0.0
  %1511 = vmatpush1.msra.mxu0 0.0
  %1512 = vmatprep.subr.mxu0 0.0
  %1513 = vmatpush1.msra.mxu0 0.0
  %1514 = vmatprep.subr.mxu0 0.0
  %1515 = vmatpush1.msra.mxu0 0.0
  %1516 = vmatprep.subr.mxu0 0.0
  %1517 = vmatpush1.msra.mxu0 0.0
  %1518 = vmatprep.subr.mxu0 0.0
  %1519 = vmatpush1.msra.mxu0 0.0
  %1520 = vmatprep.subr.mxu0 0.0
  %1521 = vmatpush1.msra.mxu0 0.0
  %1522 = vmatprep.subr.mxu0 0.0
  %1523 = vmatpush1.msra.mxu0 0.0
  %1524 = vmatprep.subr.mxu0 0.0
  %1525 = vmatpush1.msra.mxu0 0.0
  %1526 = vmatprep.subr.mxu0 0.0
  %1527 = vmatpush1.msra.mxu0 0.0
  %1528 = vmatprep.subr.mxu0 0.0
  %1529 = vmatpush1.msra.mxu0 0.0
  %1530 = vmatprep.subr.mxu0 0.0
  %1531 = vmatpush1.msra.mxu0 0.0
  %1532 = vmatprep.subr.mxu0 0.0
  %1533 = vmatpush1.msra.mxu0 0.0
  %1534 = vmatprep.subr.mxu0 0.0
  %1535 = vmatpush1.msra.mxu0 0.0
  %1536 = vmatprep.mubr.f32.mxu0 0.0
  %1537 = vmatmul.mubr.f32.gmra.mrb[0].mxu0 %v1310
  %v1538 = vpop.f32.mrb[0].mxu0
  %v1539 = vadd.f32 0.0, %v1538
  %v1540 = vpop.f32.mrb[0].mxu0
  %v1541 = vadd.f32 0.0, %v1540
  %1542 = vdwg.mxu0
  %v1543 = vmul.f32 %v1397, %v889
  %v1544 = vmul.f32 %v1399, %v893
  %v1545 = vmul.f32 %v1468, %v897
  %v1546 = vmul.f32 %v1470, %v901
  %v1547 = vmul.f32 %v1539, %v905
  %v1548 = vmul.f32 %v1541, %v909
  %v1549 = vsel %vm922, %v1543, 0.0
  %v1550 = vsel %vm922, %v1544, 0.0
  %v1551 = vadd.f32 %v1549, %v1550
  %v1552 = vsel %vm922, %v1545, 0.0
  %v1553 = vadd.f32 %v1551, %v1552
  %v1554 = vsel %vm922, %v1546, 0.0
  %v1555 = vadd.f32 %v1553, %v1554
  %v1556 = vsel %vm922, %v1547, 0.0
  %v1557 = vadd.f32 %v1555, %v1556
  %v1558 = vsel %vm922, %v1548, 0.0
  %v1559 = vadd.f32 %v1557, %v1558
  %1560 = vadd.xlane.f32.xlu0 %v1559
  %v1561 = vpop.xlane.xlu0 %1560
  %v1562 = vmul.f32 %v1397, %v1397
  %v1563 = vmul.f32 %v1399, %v1399
  %v1564 = vmul.f32 %v1468, %v1468
  %v1565 = vmul.f32 %v1470, %v1470
  %v1566 = vmul.f32 %v1539, %v1539
  %v1567 = vmul.f32 %v1541, %v1541
  %v1568 = vmul.f32 %v1562, %v889
  %v1569 = vmul.f32 %v1563, %v893
  %v1570 = vmul.f32 %v1564, %v897
  %v1571 = vmul.f32 %v1565, %v901
  %v1572 = vmul.f32 %v1566, %v905
  %v1573 = vmul.f32 %v1567, %v909
  %v1574 = vsel %vm922, %v1568, 0.0
  %v1575 = vsel %vm922, %v1569, 0.0
  %v1576 = vadd.f32 %v1574, %v1575
  %v1577 = vsel %vm922, %v1570, 0.0
  %v1578 = vadd.f32 %v1576, %v1577
  %v1579 = vsel %vm922, %v1571, 0.0
  %v1580 = vadd.f32 %v1578, %v1579
  %v1581 = vsel %vm922, %v1572, 0.0
  %v1582 = vadd.f32 %v1580, %v1581
  %v1583 = vsel %vm922, %v1573, 0.0
  %v1584 = vadd.f32 %v1582, %v1583
  %1585 = vadd.xlane.f32.xlu0 %v1584
  %v1586 = vpop.xlane.xlu0 %1585
  %v1587 = vmul.f32 %v1561, 0.001953125
  %v1588 = vmul.f32 %v1586, 0.001953125
  %v1589 = vmul.f32 %v1587, %v1587
  %v1590 = vsub.f32 %v1588, %v1589
  %v1591 = vmax.f32 %v1590, 0.0
  %v1592 = vld [vmem:[%s7] sm:$0xf]
  %v1593 = vadd.f32 %v1591, 1e-05
  %v1594 = vrsqrt.pop %v1593
  %v1595 = vmul.f32 %v1592, %v1594
  %1597 = vset.pattern.permute.xlu0 0
  %1598 = vperm.xlu0 %1597, %v1595
  %v1599 = vpop.permute.xlu0 %1598
  %v1601 = vmul.f32 %v1397, %v1599
  %v1602 = vmul.f32 %v1399, %v1599
  %v1603 = vmul.f32 %v1468, %v1599
  %v1604 = vmul.f32 %v1470, %v1599
  %v1605 = vmul.f32 %v1539, %v1599
  %v1606 = vmul.f32 %v1541, %v1599
  %v1607 = vld [vmem:[%s8] sm:$0xf]
  %v1608 = vmul.f32 %v1587, %v1595
  %v1609 = vsub.f32 %v1607, %v1608
  %1611 = vset.pattern.permute.xlu0 0
  %1612 = vperm.xlu0 %1611, %v1609
  %v1613 = vpop.permute.xlu0 %1612
  %v1615 = vadd.f32 %v1601, %v1613
  %v1616 = vadd.f32 %v1602, %v1613
  %v1617 = vadd.f32 %v1603, %v1613
  %v1618 = vadd.f32 %v1604, %v1613
  %v1619 = vadd.f32 %v1605, %v1613
  %v1620 = vadd.f32 %v1606, %v1613
  %v1621 = vmax.f32 %v1615, 0.0
  %v1622 = vmax.f32 %v1616, 0.0
  %v1623 = vmax.f32 %v1617, 0.0
  %v1624 = vmax.f32 %v1618, 0.0
  %v1625 = vmax.f32 %v1619, 0.0
  %v1626 = vmax.f32 %v1620, 0.0
  %v1633 = vcombine.low %v1621, %v1622
  %v1634 = vcombine.low %v1623, %v1624
  %v1635 = vcombine.low %v1625, %v1626
  %1639 = vst [vmem:[%s9] sm:$0xff] %v1633
  %1640 = vst [vmem:[%s9 + $0x8] sm:$0xff] %v1634
  %1641 = vst [vmem:[%s9 + $0x10] sm:$0xff] %v1635
  // Predicated region
  $region38: #{up_forward.1} parent=0 // pred_check
    _
  $region39: #{up_forward.1} parent=0 // pred_check_branch
    %1643 = sbr.rel (0) target = $region41
  $region40: #{up_forward.1} parent=0 // pred_region
    _
  $region41: #{up_forward.1} parent=0 // pred_fallthru
    _
  // Predicated region
  $region42: #{up_forward.1} parent=0 // pred_check
    _
  $region43: #{up_forward.1} parent=0 // pred_check_branch
    %1645 = sbr.rel (0) target = $region45
  $region44: #{up_forward.1} parent=0 // pred_region
    _
  $region45: #{up_forward.1} parent=0 // pred_fallthru
    _

</llo_original>
